<compile_context>
chip_gen: v7x
topology: tpu7x:2x2x1
jax: 0.10.0
libtpu: 0.0.40
codegen_flags: <defaults>
</compile_context>

<pallas_src>
import functools

import jax
import jax.numpy as jnp
from jax.experimental import pallas as pl
from jax.experimental.pallas import tpu as pltpu


def _round_up(x, m):
    return (x + m - 1) // m * m


def _block_kernel(x_ref, w_ref, p_ref, film_ref, vmask_ref, o_ref, patch_ref, *,
                  Wp, L_pad, Cin_p, Cpg, gpb, inv_n, gn_eps, chunk):
    Cblk = gpb * Cpg
    offs = [dy * Wp + dx for dy in range(3) for dx in range(3)]

    w = w_ref[...]                        # (Cblk, 9*Cin_p)
    bias = p_ref[:, 0:1]                  # (Cblk, 1)

    # ---- pass 0: 3x3 conv as ONE fused-K matmul per spatial chunk ----
    # Tap (dy,dx) of the flattened padded image is a lane-offset slice ("wide
    # row" trick); taps are staged into a persistent VMEM scratch at static
    # sublane offsets (no concatenate copies, stable MXU RHS address), and the
    # result accumulates directly into the f32 output block.
    c0 = 0
    while c0 < L_pad:
        tl = min(chunk, L_pad - c0)
        for t, o in enumerate(offs):
            patch_ref[t * Cin_p:(t + 1) * Cin_p, 0:tl] = \
                x_ref[0, :, c0 + o:c0 + o + tl]
        res = jnp.dot(w, patch_ref[:, 0:tl], preferred_element_type=jnp.float32)
        o_ref[0, :, c0:c0 + tl] = res + bias
        c0 += tl

    # per-group segment-sum on VPU/XLU (no tiny one-hot MXU dots):
    # (Cblk, 1) per-channel column -> per-group sums broadcast back per channel.
    def group_expand(col):
        rows = []
        for g in range(gpb):
            s = jnp.sum(col[g * Cpg:(g + 1) * Cpg, :], axis=0, keepdims=True)
            rows.append(jnp.broadcast_to(s, (Cpg, 1)))
        return rows[0] if gpb == 1 else jnp.concatenate(rows, axis=0)

    # ---- pass 1: masked per-channel sums -> per-group mean ----
    csum = jnp.zeros((Cblk, 1), jnp.float32)
    c0 = 0
    while c0 < L_pad:
        tl = min(chunk, L_pad - c0)
        a = o_ref[0, :, c0:c0 + tl]
        m = vmask_ref[:, c0:c0 + tl]
        csum = csum + jnp.sum(a * m, axis=1, keepdims=True)
        c0 += tl
    mean_c = group_expand(csum) * inv_n                     # (Cblk, 1)

    # ---- pass 2: centered square sums (two-pass variance) ----
    csq = jnp.zeros((Cblk, 1), jnp.float32)
    c0 = 0
    while c0 < L_pad:
        tl = min(chunk, L_pad - c0)
        a = o_ref[0, :, c0:c0 + tl]
        m = vmask_ref[:, c0:c0 + tl]
        d = (a - mean_c) * m                                # garbage cols -> 0
        csq = csq + jnp.sum(d * d, axis=1, keepdims=True)
        c0 += tl
    var_c = group_expand(csq) * inv_n

    # fold GroupNorm affine + FiLM into one per-channel multiply-add
    gamma = p_ref[:, 1:2]
    beta = p_ref[:, 2:3]
    sc = film_ref[0, :, 0:1]
    sh = film_ref[0, :, 1:2]
    a_mul = jax.lax.rsqrt(var_c + gn_eps) * gamma * (sc + 1.0)   # (Cblk, 1)
    a_add = beta * (sc + 1.0) + sh                               # (Cblk, 1)

    # ---- pass 3: normalize + FiLM + SiLU, chunked to bound live temporaries ----
    c0 = 0
    while c0 < L_pad:
        tl = min(chunk, L_pad - c0)
        a = o_ref[0, :, c0:c0 + tl]
        y = (a - mean_c) * a_mul + a_add
        o_ref[0, :, c0:c0 + tl] = y * jax.nn.sigmoid(y)
        c0 += tl


def _pick_cout_block(Cout, Cpg, groups):
    """Channel block = whole number of GroupNorm groups; 8-aligned unless full."""
    if Cout <= 256:
        return Cout
    for gpb in range(groups, 0, -1):
        blk = gpb * Cpg
        if groups % gpb == 0 and blk <= 256 and blk % 8 == 0:
            return blk
    return Cpg if Cpg % 8 == 0 else Cout


def block_forward(x_nchw, weight_oihw, bias, gamma, beta, scale_shift=None,
                  *, groups=8, matmul_dtype=jnp.bfloat16):
    """Pallas implementation of Block.forward (WSConv3x3 + GroupNorm + FiLM + SiLU)."""
    B, Cin, H, W = x_nchw.shape
    Cout = weight_oihw.shape[0]
    assert Cout % groups == 0
    Cpg = Cout // groups
    Wp = W + 2
    L = H * Wp                                     # "wide" spatial length
    L_pad = _round_up(L, 128)                      # lane-dense output length

    # generation-aware chunk & VMEM budget
    try:
        vmem_cap = int(getattr(pltpu.get_tpu_info(), "vmem_capacity_bytes",
                               64 * 2**20))
    except Exception:
        vmem_cap = 64 * 2**20
    chunk = min(L_pad, 2048 if vmem_cap > 80 * 2**20 else 1024)

    it = jnp.dtype(matmul_dtype).itemsize
    cin_mult = 16 if it == 2 else 8                # packed-vreg aligned tap rows
    Cin_p = _round_up(Cin, cin_mult)
    Npadp = _round_up(L_pad + 2 * Wp + 2, 128)     # flattened padded length + halo

    # padded, channel-major, spatially-flattened input (cast folded into the pad)
    xp = jnp.pad(x_nchw.astype(matmul_dtype),
                 ((0, 0), (0, Cin_p - Cin), (1, 1), (1, 1)))
    xf = jnp.pad(xp.reshape(B, Cin_p, (H + 2) * Wp),
                 ((0, 0), (0, 0), (0, Npadp - (H + 2) * Wp)))

    # ---- weight standardization (grid-invariant -> hoisted, two-pass variance) ----
    w = weight_oihw.astype(jnp.float32)
    wm = jnp.mean(w, axis=(1, 2, 3), keepdims=True)
    wc = w - wm
    wv = jnp.mean(wc * wc, axis=(1, 2, 3), keepdims=True)
    w_std = wc * jax.lax.rsqrt(wv + 1e-5)                           # (Cout, Cin, 3, 3)
    w_std = jnp.pad(w_std, ((0, 0), (0, Cin_p - Cin), (0, 0), (0, 0)))
    # column order must match the patch rows: index = (dy*3+dx)*Cin_p + c
    w_lhs = jnp.transpose(w_std, (0, 2, 3, 1)).reshape(Cout, 9 * Cin_p)
    w_lhs = w_lhs.astype(matmul_dtype)

    params = jnp.stack([bias, gamma, beta], axis=1).astype(jnp.float32)  # (Cout, 3)
    if scale_shift is None:
        film = jnp.zeros((B, Cout, 2), jnp.float32)
    else:
        scale, shift = scale_shift
        film = jnp.stack([scale.reshape(B, Cout), shift.reshape(B, Cout)],
                         axis=2).astype(jnp.float32)                     # (B, Cout, 2)

    # valid-column mask for the wide (H, W+2) layout (+ the L..L_pad tail)
    pos = jnp.arange(L_pad)
    vmask = (((pos % Wp) < W) & (pos < L)).astype(jnp.float32).reshape(1, L_pad)

    Cout_blk = _pick_cout_block(Cout, Cpg, groups)
    gpb = Cout_blk // Cpg
    n_cb = Cout // Cout_blk

    kernel = functools.partial(
        _block_kernel, Wp=Wp, L_pad=L_pad, Cin_p=Cin_p, Cpg=Cpg, gpb=gpb,
        inv_n=1.0 / float(H * W * Cpg), gn_eps=1e-5, chunk=chunk)

    est = (2 * Cin_p * Npadp * it            # input block (double buffered)
           + 2 * Cout_blk * 9 * Cin_p * it   # weights
           + 2 * Cout_blk * L_pad * 4        # output / accumulator block
           + 9 * Cin_p * chunk * it          # patch scratch
           + 2 * L_pad * 4                   # mask
           + 6 * Cout_blk * chunk * 4)       # working temporaries headroom
    cap_allowed = min(max(vmem_cap - 16 * 2**20, 32 * 2**20), 100 * 2**20)
    vmem_limit = int(min(cap_allowed, max(32 * 2**20, 2 * est)))

    out = pl.pallas_call(
        kernel,
        out_shape=jax.ShapeDtypeStruct((B, Cout, L_pad), jnp.float32),
        grid_spec=pltpu.PrefetchScalarGridSpec(
            num_scalar_prefetch=0,
            grid=(B, n_cb),
            in_specs=[
                pl.BlockSpec((1, Cin_p, Npadp), lambda b, cb: (b, 0, 0)),
                pl.BlockSpec((Cout_blk, 9 * Cin_p), lambda b, cb: (cb, 0)),
                pl.BlockSpec((Cout_blk, 3), lambda b, cb: (cb, 0)),
                pl.BlockSpec((1, Cout_blk, 2), lambda b, cb: (b, cb, 0)),
                pl.BlockSpec((1, L_pad), lambda b, cb: (0, 0)),
            ],
            out_specs=pl.BlockSpec((1, Cout_blk, L_pad), lambda b, cb: (b, cb, 0)),
            scratch_shapes=[pltpu.VMEM((9 * Cin_p, chunk), matmul_dtype)],
        ),
        compiler_params=pltpu.CompilerParams(
            dimension_semantics=("parallel", "parallel"),
            vmem_limit_bytes=vmem_limit),
    )(xf, w_lhs, params, film, vmask)

    # (B, Cout, H, W+2): drop padded tail + the two garbage columns -> NCHW
    return out[:, :, :L].reshape(B, Cout, H, Wp)[:, :, :, :W]


block_forward = jax.jit(block_forward, static_argnames=("groups", "matmul_dtype"))


def _ref_block(x_nchw, weight, bias, gamma, beta, scale_shift, groups):
    """Pure-JAX reference matching the PyTorch module semantics (float32)."""
    eps = 1e-5
    wm = weight.mean(axis=(1, 2, 3), keepdims=True)
    wv = weight.var(axis=(1, 2, 3), keepdims=True)
    wn = (weight - wm) * jax.lax.rsqrt(wv + eps)
    y = jax.lax.conv_general_dilated(
        x_nchw, wn, window_strides=(1, 1), padding='SAME',
        dimension_numbers=('NCHW', 'OIHW', 'NCHW'))
    y = y + bias[None, :, None, None]
    B, C, H, W = y.shape
    yg = y.reshape(B, groups, C // groups, H, W)
    m = yg.mean(axis=(2, 3, 4), keepdims=True)
    v = yg.var(axis=(2, 3, 4), keepdims=True)
    yn = (yg - m) * jax.lax.rsqrt(v + 1e-5)
    yn = yn.reshape(B, C, H, W) * gamma[None, :, None, None] + beta[None, :, None, None]
    if scale_shift is not None:
        scale, shift = scale_shift
        yn = yn * (scale.reshape(B, C, 1, 1) + 1.0) + shift.reshape(B, C, 1, 1)
    return yn * jax.nn.sigmoid(yn)


if __name__ == "__main__":
    B, dim, dim_out, H, W, groups = 2, 4, 16, 16, 16, 8

    key = jax.random.PRNGKey(0)
    kx, kw, kb, kg, kbe, ksc, ksh = jax.random.split(key, 7)

    x = jax.random.normal(kx, (B, dim, H, W), jnp.float32)
    weight = 0.2 * jax.random.normal(kw, (dim_out, dim, 3, 3), jnp.float32)
    bias = 0.1 * jax.random.normal(kb, (dim_out,), jnp.float32)
    gamma = 1.0 + 0.1 * jax.random.normal(kg, (dim_out,), jnp.float32)
    beta = 0.1 * jax.random.normal(kbe, (dim_out,), jnp.float32)
    scale = 0.1 * jax.random.normal(ksc, (B, dim_out), jnp.float32)
    shift = 0.1 * jax.random.normal(ksh, (B, dim_out), jnp.float32)

    ref = _ref_block(x, weight, bias, gamma, beta, (scale, shift), groups)
    ref = jax.block_until_ready(ref)

    # exact path: f32 MXU operands, tight tolerance
    out_f32 = block_forward(x, weight, bias, gamma, beta,
                            scale_shift=(scale, shift), groups=groups,
                            matmul_dtype=jnp.float32)
    out_f32 = jax.block_until_ready(out_f32)
    assert out_f32.shape == (B, dim_out, H, W)
    err32 = float(jnp.max(jnp.abs(out_f32 - ref)))
    assert err32 < 1e-3, f"f32 path max abs diff {err32}"

    # fast path (default): bf16 MXU operands, f32 accumulation / norm math
    out_bf16 = block_forward(x, weight, bias, gamma, beta,
                             scale_shift=(scale, shift), groups=groups)
    out_bf16 = jax.block_until_ready(out_bf16)
    assert out_bf16.shape == (B, dim_out, H, W)
    err16 = float(jnp.max(jnp.abs(out_bf16 - ref)))
    assert err16 < 5e-2, f"bf16 path max abs diff {err16}"

    # no-FiLM path (scale_shift=None) must also match
    ref_nf = jax.block_until_ready(
        _ref_block(x, weight, bias, gamma, beta, None, groups))
    out_nf = jax.block_until_ready(
        block_forward(x, weight, bias, gamma, beta, scale_shift=None,
                      groups=groups, matmul_dtype=jnp.float32))
    errnf = float(jnp.max(jnp.abs(out_nf - ref_nf)))
    assert errnf < 1e-3, f"no-FiLM path max abs diff {errnf}"

    print("KERNEL_OK")
</pallas_src>

<mosaic_0001>
module attributes {stable_mosaic.version = 11 : i64} {
  func.func @_block_kernel(%arg0: i32, %arg1: i32, %arg2: memref<1x8x512xf32, #tpu.memory_space<vmem>>, %arg3: memref<16x72xf32, #tpu.memory_space<vmem>>, %arg4: memref<16x3xf32, #tpu.memory_space<vmem>>, %arg5: memref<1x16x2xf32, #tpu.memory_space<vmem>>, %arg6: memref<1x384xf32, #tpu.memory_space<vmem>>, %arg7: memref<1x16x384xf32, #tpu.memory_space<vmem>>, %arg8: memref<72x384xf32, #tpu.memory_space<vmem>>) attributes {dimension_semantics = [#tpu.dimension_semantics<parallel>, #tpu.dimension_semantics<parallel>], iteration_bounds = array<i64: 2, 1>, scalar_prefetch = 0 : i64, scratch_operands = 1 : i64, tpu.core_type = #tpu.core_type<tc>, window_params = [{transform_indices = @transform_0, window_bounds = array<i64: 1, 8, 512>}, {transform_indices = @transform_1, window_bounds = array<i64: 16, 72>}, {transform_indices = @transform_2, window_bounds = array<i64: 16, 3>}, {transform_indices = @transform_3, window_bounds = array<i64: 1, 16, 2>}, {pipeline_mode = #tpu.pipeline_mode<synchronous>, transform_indices = @transform_4, window_bounds = array<i64: 1, 384>}, {transform_indices = @transform_5, window_bounds = array<i64: 1, 16, 384>}]} {
    %c0 = arith.constant 0 : index
    %c0_0 = arith.constant 0 : index
    %0 = vector.load %arg3[%c0, %c0_0] : memref<16x72xf32, #tpu.memory_space<vmem>>, vector<16x72xf32>
    %c0_1 = arith.constant 0 : index
    %c0_2 = arith.constant 0 : index
    %1 = vector.load %arg4[%c0_1, %c0_2] : memref<16x3xf32, #tpu.memory_space<vmem>>, vector<16x1xf32>
    %c0_3 = arith.constant 0 : index
    %c0_4 = arith.constant 0 : index
    %c0_5 = arith.constant 0 : index
    %2 = vector.load %arg2[%c0_3, %c0_4, %c0_5] : memref<1x8x512xf32, #tpu.memory_space<vmem>>, vector<1x8x384xf32>
    %3 = vector.shape_cast %2 : vector<1x8x384xf32> to vector<8x384xf32>
    %c0_6 = arith.constant 0 : index
    %c0_7 = arith.constant 0 : index
    %4 = vector.load %arg8[%c0_6, %c0_7] : memref<72x384xf32, #tpu.memory_space<vmem>>, vector<8x384xf32>
    tpu.vector_store %arg8[%c0_6, %c0_7], %3 {strides = array<i32>} : memref<72x384xf32, #tpu.memory_space<vmem>>, vector<8x384xf32>,
    %c0_8 = arith.constant 0 : index
    %c0_9 = arith.constant 0 : index
    %c1 = arith.constant 1 : index
    %5 = vector.load %arg2[%c0_8, %c0_9, %c1] : memref<1x8x512xf32, #tpu.memory_space<vmem>>, vector<1x8x384xf32>
    %6 = vector.shape_cast %5 : vector<1x8x384xf32> to vector<8x384xf32>
    %c8 = arith.constant 8 : index
    %c0_10 = arith.constant 0 : index
    %7 = vector.load %arg8[%c8, %c0_10] : memref<72x384xf32, #tpu.memory_space<vmem>>, vector<8x384xf32>
    tpu.vector_store %arg8[%c8, %c0_10], %6 {strides = array<i32>} : memref<72x384xf32, #tpu.memory_space<vmem>>, vector<8x384xf32>,
    %c0_11 = arith.constant 0 : index
    %c0_12 = arith.constant 0 : index
    %c2 = arith.constant 2 : index
    %8 = vector.load %arg2[%c0_11, %c0_12, %c2] : memref<1x8x512xf32, #tpu.memory_space<vmem>>, vector<1x8x384xf32>
    %9 = vector.shape_cast %8 : vector<1x8x384xf32> to vector<8x384xf32>
    %c16 = arith.constant 16 : index
    %c0_13 = arith.constant 0 : index
    %10 = vector.load %arg8[%c16, %c0_13] : memref<72x384xf32, #tpu.memory_space<vmem>>, vector<8x384xf32>
    tpu.vector_store %arg8[%c16, %c0_13], %9 {strides = array<i32>} : memref<72x384xf32, #tpu.memory_space<vmem>>, vector<8x384xf32>,
    %c0_14 = arith.constant 0 : index
    %c0_15 = arith.constant 0 : index
    %c18 = arith.constant 18 : index
    %11 = vector.load %arg2[%c0_14, %c0_15, %c18] : memref<1x8x512xf32, #tpu.memory_space<vmem>>, vector<1x8x384xf32>
    %12 = vector.shape_cast %11 : vector<1x8x384xf32> to vector<8x384xf32>
    %c24 = arith.constant 24 : index
    %c0_16 = arith.constant 0 : index
    %13 = vector.load %arg8[%c24, %c0_16] : memref<72x384xf32, #tpu.memory_space<vmem>>, vector<8x384xf32>
    tpu.vector_store %arg8[%c24, %c0_16], %12 {strides = array<i32>} : memref<72x384xf32, #tpu.memory_space<vmem>>, vector<8x384xf32>,
    %c0_17 = arith.constant 0 : index
    %c0_18 = arith.constant 0 : index
    %c19 = arith.constant 19 : index
    %14 = vector.load %arg2[%c0_17, %c0_18, %c19] : memref<1x8x512xf32, #tpu.memory_space<vmem>>, vector<1x8x384xf32>
    %15 = vector.shape_cast %14 : vector<1x8x384xf32> to vector<8x384xf32>
    %c32 = arith.constant 32 : index
    %c0_19 = arith.constant 0 : index
    %16 = vector.load %arg8[%c32, %c0_19] : memref<72x384xf32, #tpu.memory_space<vmem>>, vector<8x384xf32>
    tpu.vector_store %arg8[%c32, %c0_19], %15 {strides = array<i32>} : memref<72x384xf32, #tpu.memory_space<vmem>>, vector<8x384xf32>,
    %c0_20 = arith.constant 0 : index
    %c0_21 = arith.constant 0 : index
    %c20 = arith.constant 20 : index
    %17 = vector.load %arg2[%c0_20, %c0_21, %c20] : memref<1x8x512xf32, #tpu.memory_space<vmem>>, vector<1x8x384xf32>
    %18 = vector.shape_cast %17 : vector<1x8x384xf32> to vector<8x384xf32>
    %c40 = arith.constant 40 : index
    %c0_22 = arith.constant 0 : index
    %19 = vector.load %arg8[%c40, %c0_22] : memref<72x384xf32, #tpu.memory_space<vmem>>, vector<8x384xf32>
    tpu.vector_store %arg8[%c40, %c0_22], %18 {strides = array<i32>} : memref<72x384xf32, #tpu.memory_space<vmem>>, vector<8x384xf32>,
    %c0_23 = arith.constant 0 : index
    %c0_24 = arith.constant 0 : index
    %c36 = arith.constant 36 : index
    %20 = vector.load %arg2[%c0_23, %c0_24, %c36] : memref<1x8x512xf32, #tpu.memory_space<vmem>>, vector<1x8x384xf32>
    %21 = vector.shape_cast %20 : vector<1x8x384xf32> to vector<8x384xf32>
    %c48 = arith.constant 48 : index
    %c0_25 = arith.constant 0 : index
    %22 = vector.load %arg8[%c48, %c0_25] : memref<72x384xf32, #tpu.memory_space<vmem>>, vector<8x384xf32>
    tpu.vector_store %arg8[%c48, %c0_25], %21 {strides = array<i32>} : memref<72x384xf32, #tpu.memory_space<vmem>>, vector<8x384xf32>,
    %c0_26 = arith.constant 0 : index
    %c0_27 = arith.constant 0 : index
    %c37 = arith.constant 37 : index
    %23 = vector.load %arg2[%c0_26, %c0_27, %c37] : memref<1x8x512xf32, #tpu.memory_space<vmem>>, vector<1x8x384xf32>
    %24 = vector.shape_cast %23 : vector<1x8x384xf32> to vector<8x384xf32>
    %c56 = arith.constant 56 : index
    %c0_28 = arith.constant 0 : index
    %25 = vector.load %arg8[%c56, %c0_28] : memref<72x384xf32, #tpu.memory_space<vmem>>, vector<8x384xf32>
    tpu.vector_store %arg8[%c56, %c0_28], %24 {strides = array<i32>} : memref<72x384xf32, #tpu.memory_space<vmem>>, vector<8x384xf32>,
    %c0_29 = arith.constant 0 : index
    %c0_30 = arith.constant 0 : index
    %c38 = arith.constant 38 : index
    %26 = vector.load %arg2[%c0_29, %c0_30, %c38] : memref<1x8x512xf32, #tpu.memory_space<vmem>>, vector<1x8x384xf32>
    %27 = vector.shape_cast %26 : vector<1x8x384xf32> to vector<8x384xf32>
    %c64 = arith.constant 64 : index
    %c0_31 = arith.constant 0 : index
    %28 = vector.load %arg8[%c64, %c0_31] : memref<72x384xf32, #tpu.memory_space<vmem>>, vector<8x384xf32>
    tpu.vector_store %arg8[%c64, %c0_31], %27 {strides = array<i32>} : memref<72x384xf32, #tpu.memory_space<vmem>>, vector<8x384xf32>,
    %c0_32 = arith.constant 0 : index
    %c0_33 = arith.constant 0 : index
    %29 = vector.load %arg8[%c0_32, %c0_33] : memref<72x384xf32, #tpu.memory_space<vmem>>, vector<72x384xf32>
    %cst = arith.constant dense<0.000000e+00> : vector<16x384xf32>
    %30 = tpu.matmul %0, %29, %cst {dimension_numbers = #tpu.dot_dimension_numbers<[1], [0], [0], [1], [0, 0, 1, 1], [], []>} : vector<16x72xf32>, vector<72x384xf32>, vector<16x384xf32> -> vector<16x384xf32>
    %31 = vector.broadcast %1 : vector<16x1xf32> to vector<16x384xf32>
    %32 = arith.addf %30, %31 : vector<16x384xf32>
    %c0_34 = arith.constant 0 : index
    %c0_35 = arith.constant 0 : index
    %c0_36 = arith.constant 0 : index
    %33 = vector.load %arg7[%c0_34, %c0_35, %c0_36] : memref<1x16x384xf32, #tpu.memory_space<vmem>>, vector<1x16x384xf32>
    %34 = vector.shape_cast %33 : vector<1x16x384xf32> to vector<16x384xf32>
    %35 = vector.shape_cast %32 : vector<16x384xf32> to vector<1x16x384xf32>
    tpu.vector_store %arg7[%c0_34, %c0_35, %c0_36], %35 {strides = array<i32>} : memref<1x16x384xf32, #tpu.memory_space<vmem>>, vector<1x16x384xf32>,
    %cst_37 = arith.constant 0.000000e+00 : f32
    %36 = vector.broadcast %cst_37 : f32 to vector<16x1xf32>
    %c0_38 = arith.constant 0 : index
    %c0_39 = arith.constant 0 : index
    %c0_40 = arith.constant 0 : index
    %37 = vector.load %arg7[%c0_38, %c0_39, %c0_40] : memref<1x16x384xf32, #tpu.memory_space<vmem>>, vector<1x16x384xf32>
    %38 = vector.shape_cast %37 : vector<1x16x384xf32> to vector<16x384xf32>
    %c0_41 = arith.constant 0 : index
    %c0_42 = arith.constant 0 : index
    %39 = vector.load %arg6[%c0_41, %c0_42] : memref<1x384xf32, #tpu.memory_space<vmem>>, vector<1x384xf32>
    %40 = vector.broadcast %39 : vector<1x384xf32> to vector<16x384xf32>
    %41 = arith.mulf %38, %40 : vector<16x384xf32>
    %cst_43 = arith.constant dense<0.000000e+00> : vector<16xf32>
    %42 = vector.multi_reduction <add>, %41, %cst_43 [1] : vector<16x384xf32> to vector<16xf32>
    %43 = vector.shape_cast %42 : vector<16xf32> to vector<16x1xf32>
    %44 = arith.addf %36, %43 : vector<16x1xf32>
    %45 = vector.extract_strided_slice %44 {offsets = [0, 0], sizes = [2, 1], strides = [1, 1]} : vector<16x1xf32> to vector<2x1xf32>
    %cst_44 = arith.constant dense<0.000000e+00> : vector<1xf32>
    %46 = vector.multi_reduction <add>, %45, %cst_44 [0] : vector<2x1xf32> to vector<1xf32>
    %47 = vector.shape_cast %46 : vector<1xf32> to vector<1x1xf32>
    %48 = vector.shape_cast %47 : vector<1x1xf32> to vector<1x1xf32>
    %49 = vector.broadcast %48 : vector<1x1xf32> to vector<2x1xf32>
    %50 = vector.extract_strided_slice %44 {offsets = [2, 0], sizes = [2, 1], strides = [1, 1]} : vector<16x1xf32> to vector<2x1xf32>
    %cst_45 = arith.constant dense<0.000000e+00> : vector<1xf32>
    %51 = vector.multi_reduction <add>, %50, %cst_45 [0] : vector<2x1xf32> to vector<1xf32>
    %52 = vector.shape_cast %51 : vector<1xf32> to vector<1x1xf32>
    %53 = vector.shape_cast %52 : vector<1x1xf32> to vector<1x1xf32>
    %54 = vector.broadcast %53 : vector<1x1xf32> to vector<2x1xf32>
    %55 = vector.extract_strided_slice %44 {offsets = [4, 0], sizes = [2, 1], strides = [1, 1]} : vector<16x1xf32> to vector<2x1xf32>
    %cst_46 = arith.constant dense<0.000000e+00> : vector<1xf32>
    %56 = vector.multi_reduction <add>, %55, %cst_46 [0] : vector<2x1xf32> to vector<1xf32>
    %57 = vector.shape_cast %56 : vector<1xf32> to vector<1x1xf32>
    %58 = vector.shape_cast %57 : vector<1x1xf32> to vector<1x1xf32>
    %59 = vector.broadcast %58 : vector<1x1xf32> to vector<2x1xf32>
    %60 = vector.extract_strided_slice %44 {offsets = [6, 0], sizes = [2, 1], strides = [1, 1]} : vector<16x1xf32> to vector<2x1xf32>
    %cst_47 = arith.constant dense<0.000000e+00> : vector<1xf32>
    %61 = vector.multi_reduction <add>, %60, %cst_47 [0] : vector<2x1xf32> to vector<1xf32>
    %62 = vector.shape_cast %61 : vector<1xf32> to vector<1x1xf32>
    %63 = vector.shape_cast %62 : vector<1x1xf32> to vector<1x1xf32>
    %64 = vector.broadcast %63 : vector<1x1xf32> to vector<2x1xf32>
    %65 = vector.extract_strided_slice %44 {offsets = [8, 0], sizes = [2, 1], strides = [1, 1]} : vector<16x1xf32> to vector<2x1xf32>
    %cst_48 = arith.constant dense<0.000000e+00> : vector<1xf32>
    %66 = vector.multi_reduction <add>, %65, %cst_48 [0] : vector<2x1xf32> to vector<1xf32>
    %67 = vector.shape_cast %66 : vector<1xf32> to vector<1x1xf32>
    %68 = vector.shape_cast %67 : vector<1x1xf32> to vector<1x1xf32>
    %69 = vector.broadcast %68 : vector<1x1xf32> to vector<2x1xf32>
    %70 = vector.extract_strided_slice %44 {offsets = [10, 0], sizes = [2, 1], strides = [1, 1]} : vector<16x1xf32> to vector<2x1xf32>
    %cst_49 = arith.constant dense<0.000000e+00> : vector<1xf32>
    %71 = vector.multi_reduction <add>, %70, %cst_49 [0] : vector<2x1xf32> to vector<1xf32>
    %72 = vector.shape_cast %71 : vector<1xf32> to vector<1x1xf32>
    %73 = vector.shape_cast %72 : vector<1x1xf32> to vector<1x1xf32>
    %74 = vector.broadcast %73 : vector<1x1xf32> to vector<2x1xf32>
    %75 = vector.extract_strided_slice %44 {offsets = [12, 0], sizes = [2, 1], strides = [1, 1]} : vector<16x1xf32> to vector<2x1xf32>
    %cst_50 = arith.constant dense<0.000000e+00> : vector<1xf32>
    %76 = vector.multi_reduction <add>, %75, %cst_50 [0] : vector<2x1xf32> to vector<1xf32>
    %77 = vector.shape_cast %76 : vector<1xf32> to vector<1x1xf32>
    %78 = vector.shape_cast %77 : vector<1x1xf32> to vector<1x1xf32>
    %79 = vector.broadcast %78 : vector<1x1xf32> to vector<2x1xf32>
    %80 = vector.extract_strided_slice %44 {offsets = [14, 0], sizes = [2, 1], strides = [1, 1]} : vector<16x1xf32> to vector<2x1xf32>
    %cst_51 = arith.constant dense<0.000000e+00> : vector<1xf32>
    %81 = vector.multi_reduction <add>, %80, %cst_51 [0] : vector<2x1xf32> to vector<1xf32>
    %82 = vector.shape_cast %81 : vector<1xf32> to vector<1x1xf32>
    %83 = vector.shape_cast %82 : vector<1x1xf32> to vector<1x1xf32>
    %84 = vector.broadcast %83 : vector<1x1xf32> to vector<2x1xf32>
    %85 = tpu.concatenate %49, %54, %59, %64, %69, %74, %79, %84 in 0 : vector<2x1xf32>, vector<2x1xf32>, vector<2x1xf32>, vector<2x1xf32>, vector<2x1xf32>, vector<2x1xf32>, vector<2x1xf32>, vector<2x1xf32> -> vector<16x1xf32>
    %cst_52 = arith.constant 0.001953125 : f32
    %86 = vector.broadcast %cst_52 : f32 to vector<16x1xf32>
    %87 = arith.mulf %85, %86 : vector<16x1xf32>
    %cst_53 = arith.constant 0.000000e+00 : f32
    %88 = vector.broadcast %cst_53 : f32 to vector<16x1xf32>
    %c0_54 = arith.constant 0 : index
    %c0_55 = arith.constant 0 : index
    %c0_56 = arith.constant 0 : index
    %89 = vector.load %arg7[%c0_54, %c0_55, %c0_56] : memref<1x16x384xf32, #tpu.memory_space<vmem>>, vector<1x16x384xf32>
    %90 = vector.shape_cast %89 : vector<1x16x384xf32> to vector<16x384xf32>
    %c0_57 = arith.constant 0 : index
    %c0_58 = arith.constant 0 : index
    %91 = vector.load %arg6[%c0_57, %c0_58] : memref<1x384xf32, #tpu.memory_space<vmem>>, vector<1x384xf32>
    %92 = vector.broadcast %87 : vector<16x1xf32> to vector<16x384xf32>
    %93 = arith.subf %90, %92 : vector<16x384xf32>
    %94 = vector.broadcast %91 : vector<1x384xf32> to vector<16x384xf32>
    %95 = arith.mulf %93, %94 : vector<16x384xf32>
    %96 = arith.mulf %95, %95 : vector<16x384xf32>
    %cst_59 = arith.constant dense<0.000000e+00> : vector<16xf32>
    %97 = vector.multi_reduction <add>, %96, %cst_59 [1] : vector<16x384xf32> to vector<16xf32>
    %98 = vector.shape_cast %97 : vector<16xf32> to vector<16x1xf32>
    %99 = arith.addf %88, %98 : vector<16x1xf32>
    %100 = vector.extract_strided_slice %99 {offsets = [0, 0], sizes = [2, 1], strides = [1, 1]} : vector<16x1xf32> to vector<2x1xf32>
    %cst_60 = arith.constant dense<0.000000e+00> : vector<1xf32>
    %101 = vector.multi_reduction <add>, %100, %cst_60 [0] : vector<2x1xf32> to vector<1xf32>
    %102 = vector.shape_cast %101 : vector<1xf32> to vector<1x1xf32>
    %103 = vector.shape_cast %102 : vector<1x1xf32> to vector<1x1xf32>
    %104 = vector.broadcast %103 : vector<1x1xf32> to vector<2x1xf32>
    %105 = vector.extract_strided_slice %99 {offsets = [2, 0], sizes = [2, 1], strides = [1, 1]} : vector<16x1xf32> to vector<2x1xf32>
    %cst_61 = arith.constant dense<0.000000e+00> : vector<1xf32>
    %106 = vector.multi_reduction <add>, %105, %cst_61 [0] : vector<2x1xf32> to vector<1xf32>
    %107 = vector.shape_cast %106 : vector<1xf32> to vector<1x1xf32>
    %108 = vector.shape_cast %107 : vector<1x1xf32> to vector<1x1xf32>
    %109 = vector.broadcast %108 : vector<1x1xf32> to vector<2x1xf32>
    %110 = vector.extract_strided_slice %99 {offsets = [4, 0], sizes = [2, 1], strides = [1, 1]} : vector<16x1xf32> to vector<2x1xf32>
    %cst_62 = arith.constant dense<0.000000e+00> : vector<1xf32>
    %111 = vector.multi_reduction <add>, %110, %cst_62 [0] : vector<2x1xf32> to vector<1xf32>
    %112 = vector.shape_cast %111 : vector<1xf32> to vector<1x1xf32>
    %113 = vector.shape_cast %112 : vector<1x1xf32> to vector<1x1xf32>
    %114 = vector.broadcast %113 : vector<1x1xf32> to vector<2x1xf32>
    %115 = vector.extract_strided_slice %99 {offsets = [6, 0], sizes = [2, 1], strides = [1, 1]} : vector<16x1xf32> to vector<2x1xf32>
    %cst_63 = arith.constant dense<0.000000e+00> : vector<1xf32>
    %116 = vector.multi_reduction <add>, %115, %cst_63 [0] : vector<2x1xf32> to vector<1xf32>
    %117 = vector.shape_cast %116 : vector<1xf32> to vector<1x1xf32>
    %118 = vector.shape_cast %117 : vector<1x1xf32> to vector<1x1xf32>
    %119 = vector.broadcast %118 : vector<1x1xf32> to vector<2x1xf32>
    %120 = vector.extract_strided_slice %99 {offsets = [8, 0], sizes = [2, 1], strides = [1, 1]} : vector<16x1xf32> to vector<2x1xf32>
    %cst_64 = arith.constant dense<0.000000e+00> : vector<1xf32>
    %121 = vector.multi_reduction <add>, %120, %cst_64 [0] : vector<2x1xf32> to vector<1xf32>
    %122 = vector.shape_cast %121 : vector<1xf32> to vector<1x1xf32>
    %123 = vector.shape_cast %122 : vector<1x1xf32> to vector<1x1xf32>
    %124 = vector.broadcast %123 : vector<1x1xf32> to vector<2x1xf32>
    %125 = vector.extract_strided_slice %99 {offsets = [10, 0], sizes = [2, 1], strides = [1, 1]} : vector<16x1xf32> to vector<2x1xf32>
    %cst_65 = arith.constant dense<0.000000e+00> : vector<1xf32>
    %126 = vector.multi_reduction <add>, %125, %cst_65 [0] : vector<2x1xf32> to vector<1xf32>
    %127 = vector.shape_cast %126 : vector<1xf32> to vector<1x1xf32>
    %128 = vector.shape_cast %127 : vector<1x1xf32> to vector<1x1xf32>
    %129 = vector.broadcast %128 : vector<1x1xf32> to vector<2x1xf32>
    %130 = vector.extract_strided_slice %99 {offsets = [12, 0], sizes = [2, 1], strides = [1, 1]} : vector<16x1xf32> to vector<2x1xf32>
    %cst_66 = arith.constant dense<0.000000e+00> : vector<1xf32>
    %131 = vector.multi_reduction <add>, %130, %cst_66 [0] : vector<2x1xf32> to vector<1xf32>
    %132 = vector.shape_cast %131 : vector<1xf32> to vector<1x1xf32>
    %133 = vector.shape_cast %132 : vector<1x1xf32> to vector<1x1xf32>
    %134 = vector.broadcast %133 : vector<1x1xf32> to vector<2x1xf32>
    %135 = vector.extract_strided_slice %99 {offsets = [14, 0], sizes = [2, 1], strides = [1, 1]} : vector<16x1xf32> to vector<2x1xf32>
    %cst_67 = arith.constant dense<0.000000e+00> : vector<1xf32>
    %136 = vector.multi_reduction <add>, %135, %cst_67 [0] : vector<2x1xf32> to vector<1xf32>
    %137 = vector.shape_cast %136 : vector<1xf32> to vector<1x1xf32>
    %138 = vector.shape_cast %137 : vector<1x1xf32> to vector<1x1xf32>
    %139 = vector.broadcast %138 : vector<1x1xf32> to vector<2x1xf32>
    %140 = tpu.concatenate %104, %109, %114, %119, %124, %129, %134, %139 in 0 : vector<2x1xf32>, vector<2x1xf32>, vector<2x1xf32>, vector<2x1xf32>, vector<2x1xf32>, vector<2x1xf32>, vector<2x1xf32>, vector<2x1xf32> -> vector<16x1xf32>
    %cst_68 = arith.constant 0.001953125 : f32
    %141 = vector.broadcast %cst_68 : f32 to vector<16x1xf32>
    %142 = arith.mulf %140, %141 : vector<16x1xf32>
    %c0_69 = arith.constant 0 : index
    %c1_70 = arith.constant 1 : index
    %143 = vector.load %arg4[%c0_69, %c1_70] : memref<16x3xf32, #tpu.memory_space<vmem>>, vector<16x1xf32>
    %c0_71 = arith.constant 0 : index
    %c2_72 = arith.constant 2 : index
    %144 = vector.load %arg4[%c0_71, %c2_72] : memref<16x3xf32, #tpu.memory_space<vmem>>, vector<16x1xf32>
    %c0_73 = arith.constant 0 : index
    %c0_74 = arith.constant 0 : index
    %c0_75 = arith.constant 0 : index
    %145 = vector.load %arg5[%c0_73, %c0_74, %c0_75] : memref<1x16x2xf32, #tpu.memory_space<vmem>>, vector<1x16x1xf32>
    %146 = vector.shape_cast %145 : vector<1x16x1xf32> to vector<16x1xf32>
    %c0_76 = arith.constant 0 : index
    %c0_77 = arith.constant 0 : index
    %c1_78 = arith.constant 1 : index
    %147 = vector.load %arg5[%c0_76, %c0_77, %c1_78] : memref<1x16x2xf32, #tpu.memory_space<vmem>>, vector<1x16x1xf32>
    %148 = vector.shape_cast %147 : vector<1x16x1xf32> to vector<16x1xf32>
    %cst_79 = arith.constant 9.99999974E-6 : f32
    %149 = vector.broadcast %cst_79 : f32 to vector<16x1xf32>
    %150 = arith.addf %142, %149 : vector<16x1xf32>
    %151 = math.rsqrt %150 : vector<16x1xf32>
    %152 = arith.mulf %151, %143 : vector<16x1xf32>
    %cst_80 = arith.constant 1.000000e+00 : f32
    %153 = vector.broadcast %cst_80 : f32 to vector<16x1xf32>
    %154 = arith.addf %146, %153 : vector<16x1xf32>
    %155 = arith.mulf %152, %154 : vector<16x1xf32>
    %cst_81 = arith.constant 1.000000e+00 : f32
    %156 = vector.broadcast %cst_81 : f32 to vector<16x1xf32>
    %157 = arith.addf %146, %156 : vector<16x1xf32>
    %158 = arith.mulf %144, %157 : vector<16x1xf32>
    %159 = arith.addf %158, %148 : vector<16x1xf32>
    %c0_82 = arith.constant 0 : index
    %c0_83 = arith.constant 0 : index
    %c0_84 = arith.constant 0 : index
    %160 = vector.load %arg7[%c0_82, %c0_83, %c0_84] : memref<1x16x384xf32, #tpu.memory_space<vmem>>, vector<1x16x384xf32>
    %161 = vector.shape_cast %160 : vector<1x16x384xf32> to vector<16x384xf32>
    %162 = vector.broadcast %87 : vector<16x1xf32> to vector<16x384xf32>
    %163 = arith.subf %161, %162 : vector<16x384xf32>
    %164 = vector.broadcast %155 : vector<16x1xf32> to vector<16x384xf32>
    %165 = arith.mulf %163, %164 : vector<16x384xf32>
    %166 = vector.broadcast %159 : vector<16x1xf32> to vector<16x384xf32>
    %167 = arith.addf %165, %166 : vector<16x384xf32>
    %168 = arith.negf %167 : vector<16x384xf32>
    %169 = math.exp %168 : vector<16x384xf32>
    %cst_85 = arith.constant 1.000000e+00 : f32
    %170 = vector.broadcast %cst_85 : f32 to vector<16x384xf32>
    %171 = arith.addf %170, %169 : vector<16x384xf32>
    %172 = arith.divf %170, %171 : vector<16x384xf32>
    %173 = arith.mulf %167, %172 : vector<16x384xf32>
    %c0_86 = arith.constant 0 : index
    %c0_87 = arith.constant 0 : index
    %c0_88 = arith.constant 0 : index
    %174 = vector.load %arg7[%c0_86, %c0_87, %c0_88] : memref<1x16x384xf32, #tpu.memory_space<vmem>>, vector<1x16x384xf32>
    %175 = vector.shape_cast %174 : vector<1x16x384xf32> to vector<16x384xf32>
    %176 = vector.shape_cast %173 : vector<16x384xf32> to vector<1x16x384xf32>
    tpu.vector_store %arg7[%c0_86, %c0_87, %c0_88], %176 {strides = array<i32>} : memref<1x16x384xf32, #tpu.memory_space<vmem>>, vector<1x16x384xf32>,
    return
  }
  func.func @transform_0(%arg0: i32, %arg1: i32) -> (i32, i32, i32) {
    %c0_i32 = arith.constant 0 : i32
    %c0_i32_0 = arith.constant 0 : i32
    %c0_i32_1 = arith.constant 0 : i32
    return %arg0, %c0_i32, %c0_i32_0 : i32, i32, i32
  }
  func.func @transform_1(%arg0: i32, %arg1: i32) -> (i32, i32) {
    %c0_i32 = arith.constant 0 : i32
    %c0_i32_0 = arith.constant 0 : i32
    return %arg1, %c0_i32 : i32, i32
  }
  func.func @transform_2(%arg0: i32, %arg1: i32) -> (i32, i32) {
    %c0_i32 = arith.constant 0 : i32
    %c0_i32_0 = arith.constant 0 : i32
    return %arg1, %c0_i32 : i32, i32
  }
  func.func @transform_3(%arg0: i32, %arg1: i32) -> (i32, i32, i32) {
    %c0_i32 = arith.constant 0 : i32
    %c0_i32_0 = arith.constant 0 : i32
    return %arg0, %arg1, %c0_i32 : i32, i32, i32
  }
  func.func @transform_4(%arg0: i32, %arg1: i32) -> (i32, i32) {
    %c0_i32 = arith.constant 0 : i32
    %c0_i32_0 = arith.constant 0 : i32
    %c0_i32_1 = arith.constant 0 : i32
    return %c0_i32, %c0_i32_0 : i32, i32
  }
  func.func @transform_5(%arg0: i32, %arg1: i32) -> (i32, i32, i32) {
    %c0_i32 = arith.constant 0 : i32
    %c0_i32_0 = arith.constant 0 : i32
    return %arg0, %arg1, %c0_i32 : i32, i32, i32
  }
}

</mosaic_0001>

<llo_original>
// kernel: block_forward.1
$region0: #{block_forward.1}
  #allocation0 [shape = 'u32[]', space=smem, size = 0x4, offset = 0x4, fixed_abs, tag = 'smem constant byte address 0x4 - core index']
  #allocation1 [shape = 'u32[144,128]{1,0:T(1,128)}', space=vmem, size = 0x12000, scoped, tag = 'internal scratch']
  #allocation2 [shape = 'f32[72,384]{1,0:T(8,128)}', space=vmem, size = 0x1b000, scoped, tag = 'scratch operand']
  %s0 = inlined_call_operand.vmem [shape: f32[2,8,512], index: 0, kind: input, shape index: {}]
  %s1 = inlined_call_operand.vmem [shape: f32[16,72], index: 1, kind: input, shape index: {}]
  %s2 = inlined_call_operand.vmem [shape: f32[16,3], index: 2, kind: input, shape index: {}]
  %s3 = inlined_call_operand.vmem [shape: f32[2,16,2], index: 3, kind: input, shape index: {}]
  %s4 = inlined_call_operand.vmem [shape: f32[1,384], index: 4, kind: input, shape index: {}]
  %s5 = inlined_call_operand.vmem [shape: f32[2,16,384], index: 5, kind: output, shape index: {}]
  %s6 = sld [smem:[#allocation0]]
  $region53: #{block_forward.1} parent=0
    _
  %s8 = ssub.s32 1, %s6
  %s9 = scalar_select 0, %s8, %s6
  loop: start=0, step=1, limit=4
  $region2: #{block_forward.1} parent=0 // loop_pre_header
    _
  $region3: #{block_forward.1} parent=0 // loop_header
    %s11 = sphi 0, %s15
    %p12 = scmp.ge.s32.totalorder %s11, 4
    %s18 = sphi 0, %s30
    %s19 = sphi 0, %s26
    %s20 = sphi 0, %s18
    %s21 = sphi 0, %s19
    %s22 = sphi 0, %s20
    %s23 = sphi 0, %s21
    %s33 = sphi 0, %s35
    %s36 = sphi 0, %s33
    %s37 = sphi 0, %s36
    %s53 = sphi 0, %s37
    %s59 = sphi 0, %s61
    %s62 = sphi 0, %s59
    %s63 = sphi 0, %s62
    %s79 = sphi 0, %s63
    %s85 = sphi 0, %s87
    %s88 = sphi 0, %s85
    %s89 = sphi 0, %s88
    %s105 = sphi 0, %s89
    %s113 = sphi 0, %s115
    %s116 = sphi 0, %s113
    %s117 = sphi 0, %s116
    %s133 = sphi 0, %s117
    %s137 = sphi 0, %s137
    %s139 = sphi 0, %s137
    %s140 = sphi 0, %s139
    %s154 = sphi 0, %s140
    %s162 = sphi 0, %s164
    %s165 = sphi 0, %s162
    %s166 = sphi 0, %s165
    %s182 = sphi 0, %s166
  $region4: #{block_forward.1} parent=0 // loop_header_branch
    %14 = sbr.rel (%p12) target = $region8
  $region5: #{block_forward.1} parent=0 // loop_body
    %s16 = ssub.s32 %s11, 1
    %s17 = ssub.s32 %s11, 2
    %s24 = sadd.s32 1, %s19
    %p25 = scmp.ge.s32.totalorder %s24, 1
    %s26 = scalar_select %p25, 0, %s24
    %s27 = sadd.s32 1, %s18
    %s28 = scalar_select %p25, %s27, %s18
    %p29 = scmp.ge.s32.totalorder %s28, 2
    %s30 = scalar_select %p29, 0, %s28
    %s31 = ssub.s32 %s18, %s30
    %p32 = scmp.eq.s32.totalorder %s31, 0
    %s34 = sadd.s32 %s33, 1
    %s35 = scalar_select %p32, %s33, %s34
    %p38 = pneg %p32
    %p39 = scmp.eq.s32.totalorder %s11, 1
    %p40 = por %p38, %p39
    %p41 = scmp.ne.s32.totalorder %s33, %s36
    %p42 = scmp.eq.s32.totalorder %s11, 0
    %p43 = por %p41, %p42
    %p44 = scmp.ne.s32.totalorder %s33, %s36
    %p45 = scmp.eq.s32.totalorder %s16, 1
    %p46 = por %p44, %p45
    %p47 = scmp.ne.s32.totalorder %s36, %s37
    %p48 = scmp.eq.s32.totalorder %s16, 0
    %p49 = por %p47, %p48
    %p50 = scmp.ne.s32.totalorder %s36, %s37
    %p51 = scmp.eq.s32.totalorder %s17, 1
    %p52 = por %p50, %p51
    %p54 = scmp.ne.s32.totalorder %s37, %s53
    %p55 = scmp.eq.s32.totalorder %s17, 0
    %p56 = por %p54, %p55
    %s57 = ssub.s32 %s19, %s26
    %p58 = scmp.eq.s32.totalorder %s57, 0
    %s60 = sadd.s32 %s59, 1
    %s61 = scalar_select %p58, %s59, %s60
    %p64 = pneg %p58
    %p65 = scmp.eq.s32.totalorder %s11, 1
    %p66 = por %p64, %p65
    %p67 = scmp.ne.s32.totalorder %s59, %s62
    %p68 = scmp.eq.s32.totalorder %s11, 0
    %p69 = por %p67, %p68
    %p70 = scmp.ne.s32.totalorder %s59, %s62
    %p71 = scmp.eq.s32.totalorder %s16, 1
    %p72 = por %p70, %p71
    %p73 = scmp.ne.s32.totalorder %s62, %s63
    %p74 = scmp.eq.s32.totalorder %s16, 0
    %p75 = por %p73, %p74
    %p76 = scmp.ne.s32.totalorder %s62, %s63
    %p77 = scmp.eq.s32.totalorder %s17, 1
    %p78 = por %p76, %p77
    %p80 = scmp.ne.s32.totalorder %s63, %s79
    %p81 = scmp.eq.s32.totalorder %s17, 0
    %p82 = por %p80, %p81
    %s83 = ssub.s32 %s19, %s26
    %p84 = scmp.eq.s32.totalorder %s83, 0
    %s86 = sadd.s32 %s85, 1
    %s87 = scalar_select %p84, %s85, %s86
    %p90 = pneg %p84
    %p91 = scmp.eq.s32.totalorder %s11, 1
    %p92 = por %p90, %p91
    %p93 = scmp.ne.s32.totalorder %s85, %s88
    %p94 = scmp.eq.s32.totalorder %s11, 0
    %p95 = por %p93, %p94
    %p96 = scmp.ne.s32.totalorder %s85, %s88
    %p97 = scmp.eq.s32.totalorder %s16, 1
    %p98 = por %p96, %p97
    %p99 = scmp.ne.s32.totalorder %s88, %s89
    %p100 = scmp.eq.s32.totalorder %s16, 0
    %p101 = por %p99, %p100
    %p102 = scmp.ne.s32.totalorder %s88, %s89
    %p103 = scmp.eq.s32.totalorder %s17, 1
    %p104 = por %p102, %p103
    %p106 = scmp.ne.s32.totalorder %s89, %s105
    %p107 = scmp.eq.s32.totalorder %s17, 0
    %p108 = por %p106, %p107
    %s109 = ssub.s32 %s18, %s30
    %s110 = ssub.s32 %s19, %s26
    %s111 = sor.u32 %s109, %s110
    %p112 = scmp.eq.s32.totalorder %s111, 0
    %s114 = sadd.s32 %s113, 1
    %s115 = scalar_select %p112, %s113, %s114
    %p118 = pneg %p112
    %p119 = scmp.eq.s32.totalorder %s11, 1
    %p120 = por %p118, %p119
    %p121 = scmp.ne.s32.totalorder %s113, %s116
    %p122 = scmp.eq.s32.totalorder %s11, 0
    %p123 = por %p121, %p122
    %p124 = scmp.ne.s32.totalorder %s113, %s116
    %p125 = scmp.eq.s32.totalorder %s16, 1
    %p126 = por %p124, %p125
    %p127 = scmp.ne.s32.totalorder %s116, %s117
    %p128 = scmp.eq.s32.totalorder %s16, 0
    %p129 = por %p127, %p128
    %p130 = scmp.ne.s32.totalorder %s116, %s117
    %p131 = scmp.eq.s32.totalorder %s17, 1
    %p132 = por %p130, %p131
    %p134 = scmp.ne.s32.totalorder %s117, %s133
    %p135 = scmp.eq.s32.totalorder %s17, 0
    %p136 = por %p134, %p135
    %s138 = sadd.s32 %s137, 1
    %p141 = scmp.eq.s32.totalorder %s11, 1
    %p142 = scmp.ne.s32.totalorder %s137, %s139
    %p143 = scmp.eq.s32.totalorder %s11, 0
    %p144 = por %p142, %p143
    %p145 = scmp.ne.s32.totalorder %s137, %s139
    %p146 = scmp.eq.s32.totalorder %s16, 1
    %p147 = por %p145, %p146
    %p148 = scmp.ne.s32.totalorder %s139, %s140
    %p149 = scmp.eq.s32.totalorder %s16, 0
    %p150 = por %p148, %p149
    %p151 = scmp.ne.s32.totalorder %s139, %s140
    %p152 = scmp.eq.s32.totalorder %s17, 1
    %p153 = por %p151, %p152
    %p155 = scmp.ne.s32.totalorder %s140, %s154
    %p156 = scmp.eq.s32.totalorder %s17, 0
    %p157 = por %p155, %p156
    %s158 = ssub.s32 %s18, %s30
    %s159 = ssub.s32 %s19, %s26
    %s160 = sor.u32 %s158, %s159
    %p161 = scmp.eq.s32.totalorder %s160, 0
    %s163 = sadd.s32 %s162, 1
    %s164 = scalar_select %p161, %s162, %s163
    %p167 = pneg %p161
    %p168 = scmp.eq.s32.totalorder %s11, 1
    %p169 = por %p167, %p168
    %p170 = scmp.ne.s32.totalorder %s162, %s165
    %p171 = scmp.eq.s32.totalorder %s11, 0
    %p172 = por %p170, %p171
    %p173 = scmp.ne.s32.totalorder %s162, %s165
    %p174 = scmp.eq.s32.totalorder %s16, 1
    %p175 = por %p173, %p174
    %p176 = scmp.ne.s32.totalorder %s165, %s166
    %p177 = scmp.eq.s32.totalorder %s16, 0
    %p178 = por %p176, %p177
    %p179 = scmp.ne.s32.totalorder %s165, %s166
    %p180 = scmp.eq.s32.totalorder %s17, 1
    %p181 = por %p179, %p180
    %p183 = scmp.ne.s32.totalorder %s166, %s182
    %p184 = scmp.eq.s32.totalorder %s17, 0
    %p185 = por %p183, %p184
    %p186 = scmp.le.s32.totalorder 1, %s11
    %p187 = scmp.lt.s32.totalorder %s11, 3
    %p188 = pnand %p186, %p187
    %p189 = pneg %p188
    // Predicated region
    $region9: #{block_forward.1} parent=5 // pred_check
      _
    $region10: #{block_forward.1} parent=5 // pred_check_branch
      %191 = sbr.rel (%p188) target = $region12
    $region11: #{block_forward.1} parent=5 // pred_region
      %s192 = ssub.s32 %s11, 1
      // Predicated region
      $region13: #{block_forward.1} parent=11 // pred_check
        %p193 = pneg %p75
      $region14: #{block_forward.1} parent=11 // pred_check_branch
        %195 = sbr.rel (%p193) target = $region16
      $region15: #{block_forward.1} parent=11 // pred_region
        %s196 = smul.u32 2, %s21
        %p197 = scmp.lt.s32.totalorder %s196, 1
        %s198 = scalar_select %p197, %s196, 1
        %s199 = smul.addr %s198, 8
        %s200 = scalar_lea.vmem %s1, %s199
        %s201 = smul.u32 2, %s21
      $region16: #{block_forward.1} parent=11 // pred_fallthru
        _
      // Predicated region
      $region17: #{block_forward.1} parent=11 // pred_check
        %p202 = pneg %p101
      $region18: #{block_forward.1} parent=11 // pred_check_branch
        %204 = sbr.rel (%p202) target = $region20
      $region19: #{block_forward.1} parent=11 // pred_region
        %s205 = smul.u32 2, %s21
        %p206 = scmp.lt.s32.totalorder %s205, 1
        %s207 = scalar_select %p206, %s205, 1
        %s208 = smul.addr %s207, 8
        %s209 = scalar_lea.vmem %s2, %s208
        %s210 = smul.u32 2, %s21
      $region20: #{block_forward.1} parent=11 // pred_fallthru
        _
      // Predicated region
      $region21: #{block_forward.1} parent=11 // pred_check
        %p211 = pneg %p150
      $region22: #{block_forward.1} parent=11 // pred_check_branch
        %213 = sbr.rel (%p211) target = $region24
      $region23: #{block_forward.1} parent=11 // pred_region
        _
      $region24: #{block_forward.1} parent=11 // pred_fallthru
        _
    $region12: #{block_forward.1} parent=5 // pred_fallthru
      _
    %p214 = scmp.lt.s32.totalorder %s11, 2
    // Predicated region
    $region25: #{block_forward.1} parent=5 // pred_check
      %p215 = pneg %p214
    $region26: #{block_forward.1} parent=5 // pred_check_branch
      %217 = sbr.rel (%p215) target = $region28
    $region27: #{block_forward.1} parent=5 // pred_region
      // Predicated region
      $region29: #{block_forward.1} parent=27 // pred_check
        %p218 = pneg %p43
      $region30: #{block_forward.1} parent=27 // pred_check_branch
        %220 = sbr.rel (%p218) target = $region32
      $region31: #{block_forward.1} parent=27 // pred_region
        %p221 = scmp.lt.s32.totalorder %s18, 1
        %s222 = scalar_select %p221, %s18, 1
        %s223 = smul.addr %s222, 4
        %s224 = smul.addr %s223, 8
        %s225 = scalar_lea.vmem %s0, %s224
      $region32: #{block_forward.1} parent=27 // pred_fallthru
        _
      // Predicated region
      $region33: #{block_forward.1} parent=27 // pred_check
        %p226 = pneg %p123
      $region34: #{block_forward.1} parent=27 // pred_check_branch
        %228 = sbr.rel (%p226) target = $region36
      $region35: #{block_forward.1} parent=27 // pred_region
        %s229 = smul.u32 2, %s19
        %p230 = scmp.lt.s32.totalorder %s18, 1
        %s231 = scalar_select %p230, %s18, 1
        %p232 = scmp.lt.s32.totalorder %s229, 1
        %s233 = scalar_select %p232, %s229, 1
        %s234 = smul.addr %s231, 2
        %s235 = sadd.s32 %s233, %s234
        %s236 = smul.addr %s235, 8
        %s237 = scalar_lea.vmem %s3, %s236
        %s238 = smul.u32 2, %s19
      $region36: #{block_forward.1} parent=27 // pred_fallthru
        _
    $region28: #{block_forward.1} parent=5 // pred_fallthru
      _
    %p239 = scmp.le.s32.totalorder 1, %s11
    %p240 = scmp.lt.s32.totalorder %s11, 3
    %p241 = pnand %p239, %p240
    %p242 = pneg %p241
    // Predicated region
    $region37: #{block_forward.1} parent=5 // pred_check
      _
    $region38: #{block_forward.1} parent=5 // pred_check_branch
      %244 = sbr.rel (%p241) target = $region40
    $region39: #{block_forward.1} parent=5 // pred_region
      %s245 = ssub.s32 %s11, 1
      %p246 = scmp.lt.s32.totalorder %s20, 1
      %s247 = scalar_select %p246, %s20, 1
      %s248 = smul.addr %s247, 4
      %s249 = smul.addr %s248, 8
      %s250 = scalar_lea.vmem %s0, %s249
      %p251 = pneg %p49
      %p252 = pneg %p46
      %s253 = smul.u32 2, %s21
      %p254 = scmp.lt.s32.totalorder %s253, 1
      %s255 = scalar_select %p254, %s253, 1
      %s256 = smul.addr %s255, 8
      %s257 = scalar_lea.vmem %s1, %s256
      %p258 = pneg %p75
      %p259 = pneg %p72
      %s260 = smul.u32 2, %s21
      %p261 = scmp.lt.s32.totalorder %s260, 1
      %s262 = scalar_select %p261, %s260, 1
      %s263 = smul.addr %s262, 8
      %s264 = scalar_lea.vmem %s2, %s263
      %p265 = pneg %p101
      %p266 = pneg %p98
      %s267 = smul.u32 2, %s21
      %p268 = scmp.lt.s32.totalorder %s20, 1
      %s269 = scalar_select %p268, %s20, 1
      %p270 = scmp.lt.s32.totalorder %s267, 1
      %s271 = scalar_select %p270, %s267, 1
      %s272 = smul.addr %s269, 2
      %s273 = sadd.s32 %s271, %s272
      %s274 = smul.addr %s273, 8
      %s275 = scalar_lea.vmem %s3, %s274
      %p276 = pneg %p129
      %p277 = pneg %p126
      %p278 = pneg %p150
      %p279 = pneg %p147
      %p280 = pneg %p178
      %p281 = pneg %p175
      %s282 = smul.u32 2, %s21
      %p283 = scmp.lt.s32.totalorder %s20, 1
      %s284 = scalar_select %p283, %s20, 1
      %p285 = scmp.lt.s32.totalorder %s282, 1
      %s286 = scalar_select %p285, %s282, 1
      %s287 = smul.addr %s286, 3
      %s288 = smul.addr %s284, 6
      %s289 = sadd.s32 %s287, %s288
      %s290 = smul.addr %s289, 8
      %s291 = scalar_lea.vmem %s5, %s290
      %p292 = scmp.lt.s32.totalorder %s20, 1
      %s293 = scalar_select %p292, %s20, 1
      %s294 = smul.addr %s293, 4
      %s295 = smul.addr %s294, 8
      %s296 = scalar_lea.vmem %s0, %s295
      %s297 = smul.u32 2, %s21
      %p298 = scmp.lt.s32.totalorder %s297, 1
      %s299 = scalar_select %p298, %s297, 1
      %s300 = smul.addr %s299, 8
      %s301 = scalar_lea.vmem %s1, %s300
      %s302 = smul.u32 2, %s21
      %s303 = smul.u32 2, %s21
      %p304 = scmp.lt.s32.totalorder %s303, 1
      %s305 = scalar_select %p304, %s303, 1
      %s306 = smul.addr %s305, 8
      %s307 = scalar_lea.vmem %s2, %s306
      %s308 = smul.u32 2, %s21
      %s309 = smul.u32 2, %s21
      %p310 = scmp.lt.s32.totalorder %s20, 1
      %s311 = scalar_select %p310, %s20, 1
      %p312 = scmp.lt.s32.totalorder %s309, 1
      %s313 = scalar_select %p312, %s309, 1
      %s314 = smul.addr %s311, 2
      %s315 = sadd.s32 %s313, %s314
      %s316 = smul.addr %s315, 8
      %s317 = scalar_lea.vmem %s3, %s316
      %s318 = smul.u32 2, %s21
      %s319 = smul.u32 2, %s21
      %p320 = scmp.lt.s32.totalorder %s20, 1
      %s321 = scalar_select %p320, %s20, 1
      %p322 = scmp.lt.s32.totalorder %s319, 1
      %s323 = scalar_select %p322, %s319, 1
      %s324 = smul.addr %s323, 3
      %s325 = smul.addr %s321, 6
      %s326 = sadd.s32 %s324, %s325
      %s327 = smul.addr %s326, 8
      %s328 = scalar_lea.vmem %s5, %s327
      %s329 = smul.u32 2, %s21
      %v330 = vld [vmem:[%s301] sm:$0xff]
      %v331 = vld [vmem:[%s301 + $0x8] sm:$0xff]
      %v332 = vld [vmem:[%s307] sm:$0xff]
      %v333 = vld [vmem:[%s307 + $0x8] sm:$0xff]
      %v334 = vld [vmem:[%s296] sm:$0xff]
      %v335 = vld [vmem:[%s296 + $0x8] sm:$0xff]
      %v336 = vld [vmem:[%s296 + $0x10] sm:$0xff]
      %337 = vst [vmem:[#allocation2] sm:$0xff] %v334
      %338 = vst [vmem:[#allocation2 + $0x8] sm:$0xff] %v335
      %339 = vst [vmem:[#allocation2 + $0x10] sm:$0xff] %v336
      %v340 = vld [vmem:[%s296] sm:$0xff]
      %v341 = vld [vmem:[%s296 + $0x8] sm:$0xff]
      %v342 = vld [vmem:[%s296 + $0x10] sm:$0xff]
      %v343 = vld [vmem:[%s296 + $0x18] sm:$0xff]
      %348 = vrot.lane.b32.xlu0 %v340, 127
      %v349 = vpop.permute.xlu0 %348
      %350 = vrot.lane.b32.xlu0 %v341, 127
      %v351 = vpop.permute.xlu0 %350
      %352 = vrot.lane.b32.xlu0 %v342, 127
      %v353 = vpop.permute.xlu0 %352
      %354 = vrot.lane.b32.xlu0 %v343, 127
      %v355 = vpop.permute.xlu0 %354
      %vm356 = vcmask 1039360
      %v357 = vsel %vm356, %v349, %v351
      %v358 = vsel %vm356, %v351, %v353
      %v359 = vsel %vm356, %v353, %v355
      %363 = vst [vmem:[#allocation2 + $0x18] sm:$0xff] %v357
      %364 = vst [vmem:[#allocation2 + $0x20] sm:$0xff] %v358
      %365 = vst [vmem:[#allocation2 + $0x28] sm:$0xff] %v359
      %v366 = vld [vmem:[%s296] sm:$0xff]
      %v367 = vld [vmem:[%s296 + $0x8] sm:$0xff]
      %v368 = vld [vmem:[%s296 + $0x10] sm:$0xff]
      %v369 = vld [vmem:[%s296 + $0x18] sm:$0xff]
      %374 = vrot.lane.b32.xlu0 %v366, 126
      %v375 = vpop.permute.xlu0 %374
      %376 = vrot.lane.b32.xlu0 %v367, 126
      %v377 = vpop.permute.xlu0 %376
      %378 = vrot.lane.b32.xlu0 %v368, 126
      %v379 = vpop.permute.xlu0 %378
      %380 = vrot.lane.b32.xlu0 %v369, 126
      %v381 = vpop.permute.xlu0 %380
      %vm382 = vcmask 1031168
      %v383 = vsel %vm382, %v375, %v377
      %v384 = vsel %vm382, %v377, %v379
      %v385 = vsel %vm382, %v379, %v381
      %389 = vst [vmem:[#allocation2 + $0x30] sm:$0xff] %v383
      %390 = vst [vmem:[#allocation2 + $0x38] sm:$0xff] %v384
      %391 = vst [vmem:[#allocation2 + $0x40] sm:$0xff] %v385
      %v392 = vld [vmem:[%s296] sm:$0xff]
      %v393 = vld [vmem:[%s296 + $0x8] sm:$0xff]
      %v394 = vld [vmem:[%s296 + $0x10] sm:$0xff]
      %v395 = vld [vmem:[%s296 + $0x18] sm:$0xff]
      %400 = vrot.lane.b32.xlu0 %v392, 110
      %v401 = vpop.permute.xlu0 %400
      %402 = vrot.lane.b32.xlu0 %v393, 110
      %v403 = vpop.permute.xlu0 %402
      %404 = vrot.lane.b32.xlu0 %v394, 110
      %v405 = vpop.permute.xlu0 %404
      %406 = vrot.lane.b32.xlu0 %v395, 110
      %v407 = vpop.permute.xlu0 %406
      %vm408 = vcmask 900096
      %v409 = vsel %vm408, %v401, %v403
      %v410 = vsel %vm408, %v403, %v405
      %v411 = vsel %vm408, %v405, %v407
      %415 = vst [vmem:[#allocation2 + $0x48] sm:$0xff] %v409
      %416 = vst [vmem:[#allocation2 + $0x50] sm:$0xff] %v410
      %417 = vst [vmem:[#allocation2 + $0x58] sm:$0xff] %v411
      %v418 = vld [vmem:[%s296] sm:$0xff]
      %v419 = vld [vmem:[%s296 + $0x8] sm:$0xff]
      %v420 = vld [vmem:[%s296 + $0x10] sm:$0xff]
      %v421 = vld [vmem:[%s296 + $0x18] sm:$0xff]
      %426 = vrot.lane.b32.xlu0 %v418, 109
      %v427 = vpop.permute.xlu0 %426
      %428 = vrot.lane.b32.xlu0 %v419, 109
      %v429 = vpop.permute.xlu0 %428
      %430 = vrot.lane.b32.xlu0 %v420, 109
      %v431 = vpop.permute.xlu0 %430
      %432 = vrot.lane.b32.xlu0 %v421, 109
      %v433 = vpop.permute.xlu0 %432
      %vm434 = vcmask 891904
      %v435 = vsel %vm434, %v427, %v429
      %v436 = vsel %vm434, %v429, %v431
      %v437 = vsel %vm434, %v431, %v433
      %441 = vst [vmem:[#allocation2 + $0x60] sm:$0xff] %v435
      %442 = vst [vmem:[#allocation2 + $0x68] sm:$0xff] %v436
      %443 = vst [vmem:[#allocation2 + $0x70] sm:$0xff] %v437
      %v444 = vld [vmem:[%s296] sm:$0xff]
      %v445 = vld [vmem:[%s296 + $0x8] sm:$0xff]
      %v446 = vld [vmem:[%s296 + $0x10] sm:$0xff]
      %v447 = vld [vmem:[%s296 + $0x18] sm:$0xff]
      %452 = vrot.lane.b32.xlu0 %v444, 108
      %v453 = vpop.permute.xlu0 %452
      %454 = vrot.lane.b32.xlu0 %v445, 108
      %v455 = vpop.permute.xlu0 %454
      %456 = vrot.lane.b32.xlu0 %v446, 108
      %v457 = vpop.permute.xlu0 %456
      %458 = vrot.lane.b32.xlu0 %v447, 108
      %v459 = vpop.permute.xlu0 %458
      %vm460 = vcmask 883712
      %v461 = vsel %vm460, %v453, %v455
      %v462 = vsel %vm460, %v455, %v457
      %v463 = vsel %vm460, %v457, %v459
      %467 = vst [vmem:[#allocation2 + $0x78] sm:$0xff] %v461
      %468 = vst [vmem:[#allocation2 + $0x80] sm:$0xff] %v462
      %469 = vst [vmem:[#allocation2 + $0x88] sm:$0xff] %v463
      %v470 = vld [vmem:[%s296] sm:$0xff]
      %v471 = vld [vmem:[%s296 + $0x8] sm:$0xff]
      %v472 = vld [vmem:[%s296 + $0x10] sm:$0xff]
      %v473 = vld [vmem:[%s296 + $0x18] sm:$0xff]
      %478 = vrot.lane.b32.xlu0 %v470, 92
      %v479 = vpop.permute.xlu0 %478
      %480 = vrot.lane.b32.xlu0 %v471, 92
      %v481 = vpop.permute.xlu0 %480
      %482 = vrot.lane.b32.xlu0 %v472, 92
      %v483 = vpop.permute.xlu0 %482
      %484 = vrot.lane.b32.xlu0 %v473, 92
      %v485 = vpop.permute.xlu0 %484
      %vm486 = vcmask 752640
      %v487 = vsel %vm486, %v479, %v481
      %v488 = vsel %vm486, %v481, %v483
      %v489 = vsel %vm486, %v483, %v485
      %493 = vst [vmem:[#allocation2 + $0x90] sm:$0xff] %v487
      %494 = vst [vmem:[#allocation2 + $0x98] sm:$0xff] %v488
      %495 = vst [vmem:[#allocation2 + $0xa0] sm:$0xff] %v489
      %v496 = vld [vmem:[%s296] sm:$0xff]
      %v497 = vld [vmem:[%s296 + $0x8] sm:$0xff]
      %v498 = vld [vmem:[%s296 + $0x10] sm:$0xff]
      %v499 = vld [vmem:[%s296 + $0x18] sm:$0xff]
      %504 = vrot.lane.b32.xlu0 %v496, 91
      %v505 = vpop.permute.xlu0 %504
      %506 = vrot.lane.b32.xlu0 %v497, 91
      %v507 = vpop.permute.xlu0 %506
      %508 = vrot.lane.b32.xlu0 %v498, 91
      %v509 = vpop.permute.xlu0 %508
      %510 = vrot.lane.b32.xlu0 %v499, 91
      %v511 = vpop.permute.xlu0 %510
      %vm512 = vcmask 744448
      %v513 = vsel %vm512, %v505, %v507
      %v514 = vsel %vm512, %v507, %v509
      %v515 = vsel %vm512, %v509, %v511
      %519 = vst [vmem:[#allocation2 + $0xa8] sm:$0xff] %v513
      %520 = vst [vmem:[#allocation2 + $0xb0] sm:$0xff] %v514
      %521 = vst [vmem:[#allocation2 + $0xb8] sm:$0xff] %v515
      %v522 = vld [vmem:[%s296] sm:$0xff]
      %v523 = vld [vmem:[%s296 + $0x8] sm:$0xff]
      %v524 = vld [vmem:[%s296 + $0x10] sm:$0xff]
      %v525 = vld [vmem:[%s296 + $0x18] sm:$0xff]
      %530 = vrot.lane.b32.xlu0 %v522, 90
      %v531 = vpop.permute.xlu0 %530
      %532 = vrot.lane.b32.xlu0 %v523, 90
      %v533 = vpop.permute.xlu0 %532
      %534 = vrot.lane.b32.xlu0 %v524, 90
      %v535 = vpop.permute.xlu0 %534
      %536 = vrot.lane.b32.xlu0 %v525, 90
      %v537 = vpop.permute.xlu0 %536
      %vm538 = vcmask 736256
      %v539 = vsel %vm538, %v531, %v533
      %v540 = vsel %vm538, %v533, %v535
      %v541 = vsel %vm538, %v535, %v537
      %545 = vst [vmem:[#allocation2 + $0xc0] sm:$0xff] %v539
      %546 = vst [vmem:[#allocation2 + $0xc8] sm:$0xff] %v540
      %547 = vst [vmem:[#allocation2 + $0xd0] sm:$0xff] %v541
      %v548 = vld [vmem:[#allocation2] sm:$0xff]
      %v549 = vld [vmem:[#allocation2 + $0x8] sm:$0xff]
      %v550 = vld [vmem:[#allocation2 + $0x10] sm:$0xff]
      %v551 = vld [vmem:[#allocation2 + $0x18] sm:$0xff]
      %v552 = vld [vmem:[#allocation2 + $0x20] sm:$0xff]
      %v553 = vld [vmem:[#allocation2 + $0x28] sm:$0xff]
      %v554 = vld [vmem:[#allocation2 + $0x30] sm:$0xff]
      %v555 = vld [vmem:[#allocation2 + $0x38] sm:$0xff]
      %v556 = vld [vmem:[#allocation2 + $0x40] sm:$0xff]
      %v557 = vld [vmem:[#allocation2 + $0x48] sm:$0xff]
      %v558 = vld [vmem:[#allocation2 + $0x50] sm:$0xff]
      %v559 = vld [vmem:[#allocation2 + $0x58] sm:$0xff]
      %v560 = vld [vmem:[#allocation2 + $0x60] sm:$0xff]
      %v561 = vld [vmem:[#allocation2 + $0x68] sm:$0xff]
      %v562 = vld [vmem:[#allocation2 + $0x70] sm:$0xff]
      %v563 = vld [vmem:[#allocation2 + $0x78] sm:$0xff]
      %v564 = vld [vmem:[#allocation2 + $0x80] sm:$0xff]
      %v565 = vld [vmem:[#allocation2 + $0x88] sm:$0xff]
      %v566 = vld [vmem:[#allocation2 + $0x90] sm:$0xff]
      %v567 = vld [vmem:[#allocation2 + $0x98] sm:$0xff]
      %v568 = vld [vmem:[#allocation2 + $0xa0] sm:$0xff]
      %v569 = vld [vmem:[#allocation2 + $0xa8] sm:$0xff]
      %v570 = vld [vmem:[#allocation2 + $0xb0] sm:$0xff]
      %v571 = vld [vmem:[#allocation2 + $0xb8] sm:$0xff]
      %v572 = vld [vmem:[#allocation2 + $0xc0] sm:$0xff]
      %v573 = vld [vmem:[#allocation2 + $0xc8] sm:$0xff]
      %v574 = vld [vmem:[#allocation2 + $0xd0] sm:$0xff]
      %576 = vset.pattern.permute.xlu0 0
      %577 = vperm.xlu0 %576, %v332
      %v578 = vpop.permute.xlu0 %577
      %581 = vset.pattern.permute.xlu0 0
      %582 = vperm.xlu0 %581, %v333
      %v583 = vpop.permute.xlu0 %582
      %vm585 = vcmask 588800
      %v587 = vsel %vm585, %v330, 0
      %v590 = vsel %vm585, %v331, 0
      %592 = vmatprep.subr.mxu0 %v549
      %593 = vmatpush1.msra.mxu0 %v548
      %594 = vmatprep.subr.mxu0 %v552
      %595 = vmatpush1.msra.mxu0 %v551
      %596 = vmatprep.subr.mxu0 %v555
      %597 = vmatpush1.msra.mxu0 %v554
      %598 = vmatprep.subr.mxu0 %v558
      %599 = vmatpush1.msra.mxu0 %v557
      %600 = vmatprep.subr.mxu0 %v561
      %601 = vmatpush1.msra.mxu0 %v560
      %602 = vmatprep.subr.mxu0 %v564
      %603 = vmatpush1.msra.mxu0 %v563
      %604 = vmatprep.subr.mxu0 %v567
      %605 = vmatpush1.msra.mxu0 %v566
      %606 = vmatprep.subr.mxu0 %v570
      %607 = vmatpush1.msra.mxu0 %v569
      %608 = vmatprep.subr.mxu0 %v573
      %609 = vmatpush1.msra.mxu0 %v572
      %610 = vmatprep.subr.mxu0 0.0
      %611 = vmatpush1.msra.mxu0 0.0
      %612 = vmatprep.subr.mxu0 0.0
      %613 = vmatpush1.msra.mxu0 0.0
      %614 = vmatprep.subr.mxu0 0.0
      %615 = vmatpush1.msra.mxu0 0.0
      %616 = vmatprep.subr.mxu0 0.0
      %617 = vmatpush1.msra.mxu0 0.0
      %618 = vmatprep.subr.mxu0 0.0
      %619 = vmatpush1.msra.mxu0 0.0
      %620 = vmatprep.subr.mxu0 0.0
      %621 = vmatpush1.msra.mxu0 0.0
      %622 = vmatprep.subr.mxu0 0.0
      %623 = vmatpush1.msra.mxu0 0.0
      %624 = vmatprep.subr.mxu0 0.0
      %625 = vmatpush1.msra.mxu0 0.0
      %626 = vmatprep.subr.mxu0 0.0
      %627 = vmatpush1.msra.mxu0 0.0
      %628 = vmatprep.subr.mxu0 0.0
      %629 = vmatpush1.msra.mxu0 0.0
      %630 = vmatprep.subr.mxu0 0.0
      %631 = vmatpush1.msra.mxu0 0.0
      %632 = vmatprep.subr.mxu0 0.0
      %633 = vmatpush1.msra.mxu0 0.0
      %634 = vmatprep.subr.mxu0 0.0
      %635 = vmatpush1.msra.mxu0 0.0
      %636 = vmatprep.subr.mxu0 0.0
      %637 = vmatpush1.msra.mxu0 0.0
      %638 = vmatprep.subr.mxu0 0.0
      %639 = vmatpush1.msra.mxu0 0.0
      %640 = vmatprep.subr.mxu0 0.0
      %641 = vmatpush1.msra.mxu0 0.0
      %642 = vmatprep.subr.mxu0 0.0
      %643 = vmatpush1.msra.mxu0 0.0
      %644 = vmatprep.subr.mxu0 0.0
      %645 = vmatpush1.msra.mxu0 0.0
      %646 = vmatprep.subr.mxu0 0.0
      %647 = vmatpush1.msra.mxu0 0.0
      %648 = vmatprep.subr.mxu0 0.0
      %649 = vmatpush1.msra.mxu0 0.0
      %650 = vmatprep.subr.mxu0 0.0
      %651 = vmatpush1.msra.mxu0 0.0
      %652 = vmatprep.subr.mxu0 0.0
      %653 = vmatpush1.msra.mxu0 0.0
      %654 = vmatprep.subr.mxu0 0.0
      %655 = vmatpush1.msra.mxu0 0.0
      %656 = vmatprep.mubr.f32.mxu0 0.0
      %657 = vmatmul.mubr.f32.gmra.mrb[0].mxu0 %v587
      %v658 = vpop.f32.mrb[0].mxu0
      %v659 = vadd.f32 %v578, %v658
      %v660 = vpop.f32.mrb[0].mxu0
      %v661 = vadd.f32 %v578, %v660
      %662 = vmatprep.mubr.f32.mxu0 0.0
      %663 = vmatmul.mubr.f32.gmra.mrb[0].mxu0 %v590
      %v664 = vpop.f32.mrb[0].mxu0
      %v665 = vadd.f32 %v583, %v664
      %v666 = vpop.f32.mrb[0].mxu0
      %v667 = vadd.f32 %v583, %v666
      %668 = vdwg.mxu0
      %669 = vmatprep.subr.mxu0 0.0
      %670 = vmatpush1.msra.mxu0 %v550
      %671 = vmatprep.subr.mxu0 0.0
      %672 = vmatpush1.msra.mxu0 %v553
      %673 = vmatprep.subr.mxu0 0.0
      %674 = vmatpush1.msra.mxu0 %v556
      %675 = vmatprep.subr.mxu0 0.0
      %676 = vmatpush1.msra.mxu0 %v559
      %677 = vmatprep.subr.mxu0 0.0
      %678 = vmatpush1.msra.mxu0 %v562
      %679 = vmatprep.subr.mxu0 0.0
      %680 = vmatpush1.msra.mxu0 %v565
      %681 = vmatprep.subr.mxu0 0.0
      %682 = vmatpush1.msra.mxu0 %v568
      %683 = vmatprep.subr.mxu0 0.0
      %684 = vmatpush1.msra.mxu0 %v571
      %685 = vmatprep.subr.mxu0 0.0
      %686 = vmatpush1.msra.mxu0 %v574
      %687 = vmatprep.subr.mxu0 0.0
      %688 = vmatpush1.msra.mxu0 0.0
      %689 = vmatprep.subr.mxu0 0.0
      %690 = vmatpush1.msra.mxu0 0.0
      %691 = vmatprep.subr.mxu0 0.0
      %692 = vmatpush1.msra.mxu0 0.0
      %693 = vmatprep.subr.mxu0 0.0
      %694 = vmatpush1.msra.mxu0 0.0
      %695 = vmatprep.subr.mxu0 0.0
      %696 = vmatpush1.msra.mxu0 0.0
      %697 = vmatprep.subr.mxu0 0.0
      %698 = vmatpush1.msra.mxu0 0.0
      %699 = vmatprep.subr.mxu0 0.0
      %700 = vmatpush1.msra.mxu0 0.0
      %701 = vmatprep.subr.mxu0 0.0
      %702 = vmatpush1.msra.mxu0 0.0
      %703 = vmatprep.subr.mxu0 0.0
      %704 = vmatpush1.msra.mxu0 0.0
      %705 = vmatprep.subr.mxu0 0.0
      %706 = vmatpush1.msra.mxu0 0.0
      %707 = vmatprep.subr.mxu0 0.0
      %708 = vmatpush1.msra.mxu0 0.0
      %709 = vmatprep.subr.mxu0 0.0
      %710 = vmatpush1.msra.mxu0 0.0
      %711 = vmatprep.subr.mxu0 0.0
      %712 = vmatpush1.msra.mxu0 0.0
      %713 = vmatprep.subr.mxu0 0.0
      %714 = vmatpush1.msra.mxu0 0.0
      %715 = vmatprep.subr.mxu0 0.0
      %716 = vmatpush1.msra.mxu0 0.0
      %717 = vmatprep.subr.mxu0 0.0
      %718 = vmatpush1.msra.mxu0 0.0
      %719 = vmatprep.subr.mxu0 0.0
      %720 = vmatpush1.msra.mxu0 0.0
      %721 = vmatprep.subr.mxu0 0.0
      %722 = vmatpush1.msra.mxu0 0.0
      %723 = vmatprep.subr.mxu0 0.0
      %724 = vmatpush1.msra.mxu0 0.0
      %725 = vmatprep.subr.mxu0 0.0
      %726 = vmatpush1.msra.mxu0 0.0
      %727 = vmatprep.subr.mxu0 0.0
      %728 = vmatpush1.msra.mxu0 0.0
      %729 = vmatprep.subr.mxu0 0.0
      %730 = vmatpush1.msra.mxu0 0.0
      %731 = vmatprep.subr.mxu0 0.0
      %732 = vmatpush1.msra.mxu0 0.0
      %733 = vmatprep.mubr.f32.mxu0 0.0
      %734 = vmatmul.mubr.f32.gmra.mrb[0].mxu0 %v587
      %v735 = vpop.f32.mrb[0].mxu0
      %v736 = vadd.f32 %v578, %v735
      %v737 = vpop.f32.mrb[0].mxu0
      %738 = vmatprep.mubr.f32.mxu0 0.0
      %739 = vmatmul.mubr.f32.gmra.mrb[0].mxu0 %v590
      %v740 = vpop.f32.mrb[0].mxu0
      %v741 = vadd.f32 %v583, %v740
      %v742 = vpop.f32.mrb[0].mxu0
      %743 = vdwg.mxu0
      %744 = vst [vmem:[%s328] sm:$0xff] %v659
      %745 = vst [vmem:[%s328 + $0x8] sm:$0xff] %v661
      %746 = vst [vmem:[%s328 + $0x10] sm:$0xff] %v736
      %747 = vst [vmem:[%s328 + $0x18] sm:$0xff] %v665
      %748 = vst [vmem:[%s328 + $0x20] sm:$0xff] %v667
      %749 = vst [vmem:[%s328 + $0x28] sm:$0xff] %v741
      %v750 = vld [vmem:[%s328] sm:$0xff]
      %v751 = vld [vmem:[%s328 + $0x8] sm:$0xff]
      %v752 = vld [vmem:[%s328 + $0x10] sm:$0xff]
      %v753 = vld [vmem:[%s328 + $0x18] sm:$0xff]
      %v754 = vld [vmem:[%s328 + $0x20] sm:$0xff]
      %v755 = vld [vmem:[%s328 + $0x28] sm:$0xff]
      %v756 = vld [vmem:[%s4] sm:$0x7]
      %v758 = vlaneseq
      %v759 = vshrl.u32 %v758, 7
      %v760 = vsub.s32 0, %v759
      %v761 = vrot.slane %v756, %v760
      %v762 = vlaneseq
      %v763 = vshrl.u32 %v762, 7
      %v764 = vsub.s32 1, %v763
      %v765 = vrot.slane %v756, %v764
      %v766 = vlaneseq
      %v767 = vshrl.u32 %v766, 7
      %v768 = vsub.s32 2, %v767
      %v769 = vrot.slane %v756, %v768
      %v773 = vmul.f32 %v750, %v761
      %v774 = vmul.f32 %v751, %v765
      %v775 = vmul.f32 %v752, %v769
      %v776 = vmul.f32 %v753, %v761
      %v777 = vmul.f32 %v754, %v765
      %v778 = vmul.f32 %v755, %v769
      %v779 = vadd.f32 %v773, %v774
      %v780 = vadd.f32 %v779, %v775
      %781 = vadd.xlane.f32.xlu0 %v780
      %v782 = vpop.xlane.xlu0 %781
      %v783 = vadd.f32 %v776, %v777
      %v784 = vadd.f32 %v783, %v778
      %785 = vadd.xlane.f32.xlu0 %v784
      %v786 = vpop.xlane.xlu0 %785
      %v787 = vadd.f32 %v782, 0.0
      %v788 = vadd.f32 %v786, 0.0
      %vm789 = vcmask 1041408
      %v790 = vsel %vm789, %v787, 0.0
      %v791 = vrot.slane %v790, 4
      %v792 = vadd.f32 %v790, %v791
      %v793 = vrot.slane %v792, 2
      %v794 = vadd.f32 %v792, %v793
      %v795 = vrot.slane %v794, 1
      %v796 = vadd.f32 %v794, %v795
      %v798 = vrot.slane %v787, 2
      %v800 = vsel %vm789, %v798, 0.0
      %v801 = vrot.slane %v800, 4
      %v802 = vadd.f32 %v800, %v801
      %v803 = vrot.slane %v802, 2
      %v804 = vadd.f32 %v802, %v803
      %v805 = vrot.slane %v804, 1
      %v806 = vadd.f32 %v804, %v805
      %v807 = vrot.slane %v787, 4
      %v809 = vsel %vm789, %v807, 0.0
      %v810 = vrot.slane %v809, 4
      %v811 = vadd.f32 %v809, %v810
      %v812 = vrot.slane %v811, 2
      %v813 = vadd.f32 %v811, %v812
      %v814 = vrot.slane %v813, 1
      %v815 = vadd.f32 %v813, %v814
      %v816 = vrot.slane %v787, 6
      %v818 = vsel %vm789, %v816, 0.0
      %v819 = vrot.slane %v818, 4
      %v820 = vadd.f32 %v818, %v819
      %v821 = vrot.slane %v820, 2
      %v822 = vadd.f32 %v820, %v821
      %v823 = vrot.slane %v822, 1
      %v824 = vadd.f32 %v822, %v823
      %v825 = vsel %vm789, %v788, 0.0
      %v826 = vrot.slane %v825, 4
      %v827 = vadd.f32 %v825, %v826
      %v828 = vrot.slane %v827, 2
      %v829 = vadd.f32 %v827, %v828
      %v830 = vrot.slane %v829, 1
      %v831 = vadd.f32 %v829, %v830
      %v833 = vrot.slane %v788, 2
      %v835 = vsel %vm789, %v833, 0.0
      %v836 = vrot.slane %v835, 4
      %v837 = vadd.f32 %v835, %v836
      %v838 = vrot.slane %v837, 2
      %v839 = vadd.f32 %v837, %v838
      %v840 = vrot.slane %v839, 1
      %v841 = vadd.f32 %v839, %v840
      %v842 = vrot.slane %v788, 4
      %v844 = vsel %vm789, %v842, 0.0
      %v845 = vrot.slane %v844, 4
      %v846 = vadd.f32 %v844, %v845
      %v847 = vrot.slane %v846, 2
      %v848 = vadd.f32 %v846, %v847
      %v849 = vrot.slane %v848, 1
      %v850 = vadd.f32 %v848, %v849
      %v851 = vrot.slane %v788, 6
      %v853 = vsel %vm789, %v851, 0.0
      %v854 = vrot.slane %v853, 4
      %v855 = vadd.f32 %v853, %v854
      %v856 = vrot.slane %v855, 2
      %v857 = vadd.f32 %v855, %v856
      %v858 = vrot.slane %v857, 1
      %v859 = vadd.f32 %v857, %v858
      %v860 = vsel %vm789, %v796, %v806
      %vm861 = vcmask 1043456
      %v862 = vsel %vm861, %v860, %v815
      %vm863 = vcmask 1045504
      %v864 = vsel %vm863, %v862, %v824
      %v865 = vsel %vm789, %v831, %v841
      %v866 = vsel %vm861, %v865, %v850
      %v867 = vsel %vm863, %v866, %v859
      %v868 = vmul.f32 %v864, 0.001953125
      %v869 = vmul.f32 %v867, 0.001953125
      %871 = vset.pattern.permute.xlu0 0
      %872 = vperm.xlu0 %871, %v868
      %v873 = vpop.permute.xlu0 %872
      %876 = vset.pattern.permute.xlu0 0
      %877 = vperm.xlu0 %876, %v869
      %v878 = vpop.permute.xlu0 %877
      %v880 = vsub.f32 %v750, %v873
      %v881 = vsub.f32 %v751, %v873
      %v882 = vsub.f32 %v752, %v873
      %v883 = vsub.f32 %v753, %v878
      %v884 = vsub.f32 %v754, %v878
      %v885 = vsub.f32 %v755, %v878
      %v886 = vmul.f32 %v880, %v761
      %v887 = vmul.f32 %v881, %v765
      %v888 = vmul.f32 %v882, %v769
      %v889 = vmul.f32 %v883, %v761
      %v890 = vmul.f32 %v884, %v765
      %v891 = vmul.f32 %v885, %v769
      %v892 = vmul.f32 %v886, %v886
      %v893 = vmul.f32 %v887, %v887
      %v894 = vmul.f32 %v888, %v888
      %v895 = vmul.f32 %v889, %v889
      %v896 = vmul.f32 %v890, %v890
      %v897 = vmul.f32 %v891, %v891
      %v898 = vadd.f32 %v892, %v893
      %v899 = vadd.f32 %v898, %v894
      %900 = vadd.xlane.f32.xlu0 %v899
      %v901 = vpop.xlane.xlu0 %900
      %v902 = vadd.f32 %v895, %v896
      %v903 = vadd.f32 %v902, %v897
      %904 = vadd.xlane.f32.xlu0 %v903
      %v905 = vpop.xlane.xlu0 %904
      %v906 = vadd.f32 %v901, 0.0
      %v907 = vadd.f32 %v905, 0.0
      %v908 = vsel %vm789, %v906, 0.0
      %v909 = vrot.slane %v908, 4
      %v910 = vadd.f32 %v908, %v909
      %v911 = vrot.slane %v910, 2
      %v912 = vadd.f32 %v910, %v911
      %v913 = vrot.slane %v912, 1
      %v914 = vadd.f32 %v912, %v913
      %v916 = vrot.slane %v906, 2
      %v918 = vsel %vm789, %v916, 0.0
      %v919 = vrot.slane %v918, 4
      %v920 = vadd.f32 %v918, %v919
      %v921 = vrot.slane %v920, 2
      %v922 = vadd.f32 %v920, %v921
      %v923 = vrot.slane %v922, 1
      %v924 = vadd.f32 %v922, %v923
      %v925 = vrot.slane %v906, 4
      %v927 = vsel %vm789, %v925, 0.0
      %v928 = vrot.slane %v927, 4
      %v929 = vadd.f32 %v927, %v928
      %v930 = vrot.slane %v929, 2
      %v931 = vadd.f32 %v929, %v930
      %v932 = vrot.slane %v931, 1
      %v933 = vadd.f32 %v931, %v932
      %v934 = vrot.slane %v906, 6
      %v936 = vsel %vm789, %v934, 0.0
      %v937 = vrot.slane %v936, 4
      %v938 = vadd.f32 %v936, %v937
      %v939 = vrot.slane %v938, 2
      %v940 = vadd.f32 %v938, %v939
      %v941 = vrot.slane %v940, 1
      %v942 = vadd.f32 %v940, %v941
      %v943 = vsel %vm789, %v907, 0.0
      %v944 = vrot.slane %v943, 4
      %v945 = vadd.f32 %v943, %v944
      %v946 = vrot.slane %v945, 2
      %v947 = vadd.f32 %v945, %v946
      %v948 = vrot.slane %v947, 1
      %v949 = vadd.f32 %v947, %v948
      %v951 = vrot.slane %v907, 2
      %v953 = vsel %vm789, %v951, 0.0
      %v954 = vrot.slane %v953, 4
      %v955 = vadd.f32 %v953, %v954
      %v956 = vrot.slane %v955, 2
      %v957 = vadd.f32 %v955, %v956
      %v958 = vrot.slane %v957, 1
      %v959 = vadd.f32 %v957, %v958
      %v960 = vrot.slane %v907, 4
      %v962 = vsel %vm789, %v960, 0.0
      %v963 = vrot.slane %v962, 4
      %v964 = vadd.f32 %v962, %v963
      %v965 = vrot.slane %v964, 2
      %v966 = vadd.f32 %v964, %v965
      %v967 = vrot.slane %v966, 1
      %v968 = vadd.f32 %v966, %v967
      %v969 = vrot.slane %v907, 6
      %v971 = vsel %vm789, %v969, 0.0
      %v972 = vrot.slane %v971, 4
      %v973 = vadd.f32 %v971, %v972
      %v974 = vrot.slane %v973, 2
      %v975 = vadd.f32 %v973, %v974
      %v976 = vrot.slane %v975, 1
      %v977 = vadd.f32 %v975, %v976
      %v978 = vsel %vm789, %v914, %v924
      %v979 = vsel %vm861, %v978, %v933
      %v980 = vsel %vm863, %v979, %v942
      %v981 = vsel %vm789, %v949, %v959
      %v982 = vsel %vm861, %v981, %v968
      %v983 = vsel %vm863, %v982, %v977
      %v984 = vmul.f32 %v980, 0.001953125
      %v985 = vmul.f32 %v983, 0.001953125
      %v986 = vld [vmem:[%s307] sm:$0xff]
      %v987 = vld [vmem:[%s307 + $0x8] sm:$0xff]
      %v988 = vld [vmem:[%s317] sm:$0xff]
      %v989 = vld [vmem:[%s317 + $0x8] sm:$0xff]
      %v990 = vadd.f32 %v984, 1e-05
      %v991 = vadd.f32 %v985, 1e-05
      %v992 = vrsqrt.pop %v990
      %v993 = vrsqrt.pop %v991
      %996 = vrot.lane.b32.xlu0 %v986, 127
      %v997 = vpop.permute.xlu0 %996
      %998 = vrot.lane.b32.xlu0 %v987, 127
      %v999 = vpop.permute.xlu0 %998
      %v1002 = vmul.f32 %v992, %v997
      %v1003 = vmul.f32 %v993, %v999
      %v1004 = vadd.f32 %v988, 1.0
      %v1005 = vadd.f32 %v989, 1.0
      %v1006 = vmul.f32 %v1002, %v1004
      %v1007 = vmul.f32 %v1003, %v1005
      %1010 = vrot.lane.b32.xlu0 %v1004, 2
      %v1011 = vpop.permute.xlu0 %1010
      %1012 = vrot.lane.b32.xlu0 %v1005, 2
      %v1013 = vpop.permute.xlu0 %1012
      %v1016 = vmul.f32 %v986, %v1011
      %v1017 = vmul.f32 %v987, %v1013
      %1020 = vrot.lane.b32.xlu0 %v988, 1
      %v1021 = vpop.permute.xlu0 %1020
      %1022 = vrot.lane.b32.xlu0 %v989, 1
      %v1023 = vpop.permute.xlu0 %1022
      %v1026 = vadd.f32 %v1016, %v1021
      %v1027 = vadd.f32 %v1017, %v1023
      %1029 = vset.pattern.permute.xlu0 0
      %1030 = vperm.xlu0 %1029, %v1006
      %v1031 = vpop.permute.xlu0 %1030
      %1034 = vset.pattern.permute.xlu0 0
      %1035 = vperm.xlu0 %1034, %v1007
      %v1036 = vpop.permute.xlu0 %1035
      %v1038 = vmul.f32 %v880, %v1031
      %v1039 = vmul.f32 %v881, %v1031
      %v1040 = vmul.f32 %v882, %v1031
      %v1041 = vmul.f32 %v883, %v1036
      %v1042 = vmul.f32 %v884, %v1036
      %v1043 = vmul.f32 %v885, %v1036
      %1045 = vset.pattern.permute.xlu0 2
      %1046 = vperm.xlu0 %1045, %v1026
      %v1047 = vpop.permute.xlu0 %1046
      %1050 = vset.pattern.permute.xlu0 2
      %1051 = vperm.xlu0 %1050, %v1027
      %v1052 = vpop.permute.xlu0 %1051
      %v1054 = vadd.f32 %v1038, %v1047
      %v1055 = vadd.f32 %v1039, %v1047
      %v1056 = vadd.f32 %v1040, %v1047
      %v1057 = vadd.f32 %v1041, %v1052
      %v1058 = vadd.f32 %v1042, %v1052
      %v1059 = vadd.f32 %v1043, %v1052
      %v1060 = vxor.u32 %v1054, 2147483648
      %v1061 = vxor.u32 %v1055, 2147483648
      %v1062 = vxor.u32 %v1056, 2147483648
      %v1063 = vxor.u32 %v1057, 2147483648
      %v1064 = vxor.u32 %v1058, 2147483648
      %v1065 = vxor.u32 %v1059, 2147483648
      %v1066 = vmul.f32 %v1060, 1.442695
      %v1067 = vpow.pop %v1066
      %v1068 = vmul.f32 %v1061, 1.442695
      %v1069 = vpow.pop %v1068
      %v1070 = vmul.f32 %v1062, 1.442695
      %v1071 = vpow.pop %v1070
      %v1072 = vmul.f32 %v1063, 1.442695
      %v1073 = vpow.pop %v1072
      %v1074 = vmul.f32 %v1064, 1.442695
      %v1075 = vpow.pop %v1074
      %v1076 = vmul.f32 %v1065, 1.442695
      %v1077 = vpow.pop %v1076
      %v1078 = vadd.f32 %v1067, 1.0
      %v1079 = vadd.f32 %v1069, 1.0
      %v1080 = vadd.f32 %v1071, 1.0
      %v1081 = vadd.f32 %v1073, 1.0
      %v1082 = vadd.f32 %v1075, 1.0
      %v1083 = vadd.f32 %v1077, 1.0
      %v1084 = vrcp.pop %v1078
      %v1085 = vmul.f32 1.0, %v1084
      %v1086 = vrcp.pop %v1079
      %v1087 = vmul.f32 1.0, %v1086
      %v1088 = vrcp.pop %v1080
      %v1089 = vmul.f32 1.0, %v1088
      %v1090 = vrcp.pop %v1081
      %v1091 = vmul.f32 1.0, %v1090
      %v1092 = vrcp.pop %v1082
      %v1093 = vmul.f32 1.0, %v1092
      %v1094 = vrcp.pop %v1083
      %v1095 = vmul.f32 1.0, %v1094
      %v1096 = vmul.f32 %v1054, %v1085
      %v1097 = vmul.f32 %v1055, %v1087
      %v1098 = vmul.f32 %v1056, %v1089
      %v1099 = vmul.f32 %v1057, %v1091
      %v1100 = vmul.f32 %v1058, %v1093
      %v1101 = vmul.f32 %v1059, %v1095
      %1102 = vst [vmem:[%s328] sm:$0xff] %v1096
      %1103 = vst [vmem:[%s328 + $0x8] sm:$0xff] %v1097
      %1104 = vst [vmem:[%s328 + $0x10] sm:$0xff] %v1098
      %1105 = vst [vmem:[%s328 + $0x18] sm:$0xff] %v1099
      %1106 = vst [vmem:[%s328 + $0x20] sm:$0xff] %v1100
      %1107 = vst [vmem:[%s328 + $0x28] sm:$0xff] %v1101
      %s1108 = smul.u32 2, %s21
      %p1109 = scmp.lt.s32.totalorder %s20, 1
      %s1110 = scalar_select %p1109, %s20, 1
      %p1111 = scmp.lt.s32.totalorder %s1108, 1
      %s1112 = scalar_select %p1111, %s1108, 1
      %s1113 = smul.addr %s1112, 3
      %s1114 = smul.addr %s1110, 6
      %s1115 = sadd.s32 %s1113, %s1114
      %s1116 = smul.addr %s1115, 8
      %s1117 = scalar_lea.vmem %s5, %s1116
      // Predicated region
      $region41: #{block_forward.1} parent=39 // pred_check
        %p1118 = pneg %p175
      $region42: #{block_forward.1} parent=39 // pred_check_branch
        %1120 = sbr.rel (%p1118) target = $region44
      $region43: #{block_forward.1} parent=39 // pred_region
        %s1121 = smul.u32 2, %s21
      $region44: #{block_forward.1} parent=39 // pred_fallthru
        _
    $region40: #{block_forward.1} parent=5 // pred_fallthru
      _
    %p1122 = scmp.le.s32.totalorder 2, %s11
    // Predicated region
    $region45: #{block_forward.1} parent=5 // pred_check
      %p1123 = pneg %p1122
    $region46: #{block_forward.1} parent=5 // pred_check_branch
      %1125 = sbr.rel (%p1123) target = $region48
    $region47: #{block_forward.1} parent=5 // pred_region
      %s1126 = ssub.s32 %s11, 2
      // Predicated region
      $region49: #{block_forward.1} parent=47 // pred_check
        %p1127 = pneg %p181
      $region50: #{block_forward.1} parent=47 // pred_check_branch
        %1129 = sbr.rel (%p1127) target = $region52
      $region51: #{block_forward.1} parent=47 // pred_region
        %s1130 = smul.u32 2, %s23
        %p1131 = scmp.lt.s32.totalorder %s22, 1
        %s1132 = scalar_select %p1131, %s22, 1
        %p1133 = scmp.lt.s32.totalorder %s1130, 1
        %s1134 = scalar_select %p1133, %s1130, 1
        %s1135 = smul.addr %s1134, 3
        %s1136 = smul.addr %s1132, 6
        %s1137 = sadd.s32 %s1135, %s1136
        %s1138 = smul.addr %s1137, 8
        %s1139 = scalar_lea.vmem %s5, %s1138
      $region52: #{block_forward.1} parent=47 // pred_fallthru
        _
    $region48: #{block_forward.1} parent=5 // pred_fallthru
      _
  $region6: #{block_forward.1} parent=0 // loop_footer
    %s15 = sadd.s32 1, %s11
  $region7: #{block_forward.1} parent=0 // loop_footer_branch
    %10 = sbr.rel target = $region3
  $region8: #{block_forward.1} parent=0 // loop_exit
    _

</llo_original>
